<compile_context>
chip_gen: v7x
topology: tpu7x:2x2x1
jax: 0.10.0
libtpu: 0.0.40
codegen_flags: <defaults>
</compile_context>

<pallas_src>
import functools

import numpy as np
import jax
import jax.numpy as jnp
from jax.experimental import pallas as pl
from jax.experimental.pallas import tpu as pltpu

_NEG_FILL = -1e30   # finite "minus infinity": never enters the support, never makes NaNs


def _round_up(a, b):
    return (a + b - 1) // b * b


def _log_sparsemax_kernel(x_ref, o_ref, *, chunk):
    """One (TB, Dp) row tile; exact sparsemax threshold via the pairwise formulation."""
    z = x_ref[...].astype(jnp.float32)                        # upcast in VMEM
    z = z - jnp.max(z, axis=-1, keepdims=True)                # row max -> 0
    tb, dp = z.shape

    # Padded columns sit at a huge negative value, so they are never strictly greater
    # than any real entry (g/G contributions are exact zeros) and never enter the support.
    g = jnp.zeros((tb, dp), jnp.float32)                      # g_j = #{i : z_i > z_j}
    G = jnp.zeros((tb, dp), jnp.float32)                      # G_j = sum{z_i : z_i > z_j}

    # i-chunked accumulation: only a (tb, chunk, dp) slab is live at a time (no full
    # (tb, dp, dp) cube, no MXU). The O(D^2) compare is VPU work; the per-chunk
    # reduction over the sublane axis rides the XLU slot.
    # TODO(synk): for D >= ~1024 switch to tau bisection (O(D * iters)) instead of the
    # pairwise O(D^2) path.
    for c in range(dp // chunk):
        zi = z[:, c * chunk:(c + 1) * chunk]                  # (tb, chunk), static slice
        gt = zi[:, :, None] > z[:, None, :]                   # (tb, chunk, dp)
        gf = jnp.where(gt, 1.0, 0.0)                          # kept f32: exact support test
        g = g + jnp.sum(gf, axis=1)
        G = G + jnp.sum(gf * zi[:, :, None], axis=1)

    valid = (1.0 + g * z > G).astype(jnp.float32)             # support membership (ties ok)
    k = jnp.sum(valid, axis=-1, keepdims=True)                # support size (>= 1)
    S = jnp.sum(valid * z, axis=-1, keepdims=True)            # sum of support values
    tau = (S - 1.0) / k                                       # threshold
    out = jnp.maximum(z - tau, 0.0)                           # sparsemax probabilities
    o_ref[...] = jnp.log(out).astype(o_ref.dtype)             # log(0) -> -inf (torch semantics)


def _vmem_limit_bytes():
    # Generation-aware: ~32 MiB on v7x (64 MiB physical / TC), 64 MiB on v5e/v6e (128 MiB).
    try:
        cap = int(pltpu.get_tpu_info().vmem_capacity_bytes)
    except Exception:
        cap = 64 * 1024 * 1024
    return int(min(cap // 2, 64 * 1024 * 1024))


def _model_bytes(tb, dp, chunk, in_bytes, out_bytes):
    slab = 2 * tb * chunk * dp * 4                    # compare/select slabs live per chunk
    temps = 8 * tb * dp * 4                           # z, g, G, valid, out + slack
    io = 2 * tb * dp * (in_bytes + out_bytes)         # double-buffered in/out tiles
    return slab + temps + io


_CHUNK_CANDIDATES = (1024, 512, 256, 128, 64, 32, 16, 8)


def _pick_chunk(tb, dp, budget, in_bytes, out_bytes):
    for c in (dp,) + _CHUNK_CANDIDATES:
        if c <= dp and dp % c == 0 and _model_bytes(tb, dp, c, in_bytes, out_bytes) <= budget:
            return c
    return 8


def _plan(N, D, in_bytes, out_bytes):
    dp = max(128, _round_up(D, 128))                  # lane-dense sparsemax axis
    vmem_limit = _vmem_limit_bytes()
    budget = vmem_limit * 3 // 4

    # Largest row tile (prefer chunk >= 64 to keep the chunk loop short) that fits.
    tb = 8
    found = False
    for min_chunk in (64, 8):
        if found:
            break
        for tb_try in (256, 192, 128, 96, 64, 48, 32, 24, 16, 8):
            for c in (dp,) + _CHUNK_CANDIDATES:
                if c < min_chunk or c > dp or dp % c:
                    continue
                if _model_bytes(tb_try, dp, c, in_bytes, out_bytes) <= budget:
                    tb, found = tb_try, True
                    break
            if found:
                break

    tb = max(8, min(tb, _round_up(N, 8)))
    # Target >= 4 grid steps when rows allow (>= 2 pipelined steps per TC on v7x).
    if N > 8 and _round_up(N, tb) // tb < 4:
        tb = max(8, _round_up((N + 3) // 4, 8))

    chunk = _pick_chunk(tb, dp, budget, in_bytes, out_bytes)
    np_rows = _round_up(N, tb)
    return dp, np_rows, tb, chunk, vmem_limit


def log_sparsemax(x, dim=0):
    """LogSparsemax forward: log(sparsemax(x, dim)). Same shape/dtype as x."""
    orig_dtype = x.dtype
    # TODO(synk): for dim != -1 the permutation could be folded into the kernel with an
    # in-kernel XLU transpose / index_map instead of this wrapper moveaxis HBM round-trip.
    x_moved = jnp.moveaxis(x, dim, -1)
    lead_shape = x_moved.shape[:-1]
    D = x_moved.shape[-1]
    N = int(np.prod(lead_shape)) if lead_shape else 1
    x2 = x_moved.reshape(N, D)

    itemsize = jnp.dtype(orig_dtype).itemsize
    Dp, Np, tb, chunk, vmem_limit = _plan(N, D, itemsize, itemsize)

    if (Np, Dp) != (N, D):
        # Pad in the ORIGINAL dtype (the kernel upcasts in VMEM); only when needed.
        # TODO(synk): the lane pad could be removed entirely with in-kernel iota masking.
        if jnp.issubdtype(orig_dtype, jnp.floating):
            fill = max(_NEG_FILL, float(jnp.finfo(orig_dtype).min))
        else:
            fill = int(jnp.iinfo(orig_dtype).min)
        x2 = jnp.pad(x2, ((0, Np - N), (0, Dp - D)), constant_values=fill)

    out2 = pl.pallas_call(
        functools.partial(_log_sparsemax_kernel, chunk=chunk),
        out_shape=jax.ShapeDtypeStruct((Np, Dp), orig_dtype),
        grid=(Np // tb,),
        in_specs=[pl.BlockSpec((tb, Dp), lambda i: (i, 0))],
        out_specs=pl.BlockSpec((tb, Dp), lambda i: (i, 0)),
        compiler_params=pltpu.CompilerParams(
            dimension_semantics=("parallel",),
            vmem_limit_bytes=vmem_limit,
        ),
    )(x2)

    out = out2[:N, :D].reshape(*lead_shape, D)
    return jnp.moveaxis(out, -1, dim).astype(orig_dtype)


def _ref_sparsemax(x, dim=0):
    """Pure-JAX sort-based reference (mirrors the PyTorch code), for validation."""
    x = x - jnp.max(x, axis=dim, keepdims=True)
    srt = -jnp.sort(-x, axis=dim)
    cs = jnp.cumsum(srt, axis=dim) - 1.0
    d = x.shape[dim]
    rho_shape = [1] * x.ndim
    rho_shape[dim] = d
    rho = jnp.arange(1, d + 1, dtype=x.dtype).reshape(rho_shape)
    support = rho * srt > cs
    k = jnp.sum(support, axis=dim, keepdims=True)
    tau = jnp.take_along_axis(cs, k.astype(jnp.int32) - 1, axis=dim) / k.astype(x.dtype)
    return jnp.maximum(x - tau, 0.0)


if __name__ == "__main__":
    key = jax.random.PRNGKey(0)
    k1, k2 = jax.random.split(key)

    # LogSparsemax() default dim=0: sparsemax over axis 0 of a (32, 16) input.
    x = jax.random.normal(k1, (32, 16), dtype=jnp.float32)
    y = jax.block_until_ready(log_sparsemax(x, dim=0))
    assert y.shape == x.shape and y.dtype == x.dtype
    p_ker = np.asarray(jnp.exp(y))                      # compare probs to avoid -inf vs -inf
    p_ref = np.asarray(_ref_sparsemax(x, dim=0))
    assert np.allclose(p_ker, p_ref, rtol=1e-5, atol=1e-5)
    assert np.allclose(p_ker.sum(axis=0), 1.0, rtol=1e-5, atol=1e-5)

    # Exercise lane padding (D=40 -> 128), row padding (N=15 -> 16) and dim=-1.
    x3 = jax.random.normal(k2, (3, 5, 40), dtype=jnp.float32)
    y3 = jax.block_until_ready(log_sparsemax(x3, dim=-1))
    assert y3.shape == x3.shape and y3.dtype == x3.dtype
    p_ker3 = np.asarray(jnp.exp(y3))
    p_ref3 = np.asarray(_ref_sparsemax(x3, dim=-1))
    assert np.allclose(p_ker3, p_ref3, rtol=1e-5, atol=1e-5)
    assert np.allclose(p_ker3.sum(axis=-1), 1.0, rtol=1e-5, atol=1e-5)

    print("KERNEL_OK")
</pallas_src>

<mosaic_0001>
module attributes {stable_mosaic.version = 11 : i64} {
  func.func @_log_sparsemax_kernel(%arg0: i32, %arg1: memref<8x128xf32, #tpu.memory_space<vmem>>, %arg2: memref<8x128xf32, #tpu.memory_space<vmem>>) attributes {dimension_semantics = [#tpu.dimension_semantics<parallel>], iteration_bounds = array<i64: 2>, scalar_prefetch = 0 : i64, scratch_operands = 0 : i64, tpu.core_type = #tpu.core_type<tc>, window_params = [{transform_indices = @transform_0, window_bounds = array<i64: 8, 128>}, {transform_indices = @transform_1, window_bounds = array<i64: 8, 128>}]} {
    %c0 = arith.constant 0 : index
    %c0_0 = arith.constant 0 : index
    %0 = vector.load %arg1[%c0, %c0_0] : memref<8x128xf32, #tpu.memory_space<vmem>>, vector<8x128xf32>
    %cst = arith.constant dense<0xFF800000> : vector<8xf32>
    %1 = vector.multi_reduction <maximumf>, %0, %cst [1] : vector<8x128xf32> to vector<8xf32>
    %2 = vector.shape_cast %1 : vector<8xf32> to vector<8x1xf32>
    %3 = vector.broadcast %2 : vector<8x1xf32> to vector<8x128xf32>
    %4 = arith.subf %0, %3 : vector<8x128xf32>
    %cst_1 = arith.constant 0.000000e+00 : f32
    %5 = vector.broadcast %cst_1 : f32 to vector<8x128xf32>
    %cst_2 = arith.constant 0.000000e+00 : f32
    %6 = vector.broadcast %cst_2 : f32 to vector<8x128xf32>
    %7 = vector.shape_cast %4 : vector<8x128xf32> to vector<8x128x1xf32>
    %8 = vector.shape_cast %4 : vector<8x128xf32> to vector<8x1x128xf32>
    %9 = vector.broadcast %7 : vector<8x128x1xf32> to vector<8x128x128xf32>
    %10 = vector.broadcast %8 : vector<8x1x128xf32> to vector<8x128x128xf32>
    %11 = arith.cmpf ogt, %9, %10 : vector<8x128x128xf32>
    %cst_3 = arith.constant 1.000000e+00 : f32
    %cst_4 = arith.constant 0.000000e+00 : f32
    %12 = vector.broadcast %cst_3 : f32 to vector<8x128x128xf32>
    %13 = vector.broadcast %cst_4 : f32 to vector<8x128x128xf32>
    %14 = arith.select %11, %12, %13 : vector<8x128x128xi1>, vector<8x128x128xf32>
    %cst_5 = arith.constant dense<0.000000e+00> : vector<8x128xf32>
    %15 = vector.multi_reduction <add>, %14, %cst_5 [1] : vector<8x128x128xf32> to vector<8x128xf32>
    %16 = arith.addf %5, %15 : vector<8x128xf32>
    %17 = vector.shape_cast %4 : vector<8x128xf32> to vector<8x128x1xf32>
    %18 = vector.broadcast %17 : vector<8x128x1xf32> to vector<8x128x128xf32>
    %19 = arith.mulf %14, %18 : vector<8x128x128xf32>
    %cst_6 = arith.constant dense<0.000000e+00> : vector<8x128xf32>
    %20 = vector.multi_reduction <add>, %19, %cst_6 [1] : vector<8x128x128xf32> to vector<8x128xf32>
    %21 = arith.addf %6, %20 : vector<8x128xf32>
    %22 = arith.mulf %16, %4 : vector<8x128xf32>
    %cst_7 = arith.constant 1.000000e+00 : f32
    %23 = vector.broadcast %cst_7 : f32 to vector<8x128xf32>
    %24 = arith.addf %23, %22 : vector<8x128xf32>
    %25 = arith.cmpf ogt, %24, %21 : vector<8x128xf32>
    %26 = arith.extui %25 : vector<8x128xi1> to vector<8x128xi32>
    %27 = arith.sitofp %26 : vector<8x128xi32> to vector<8x128xf32>
    %cst_8 = arith.constant dense<0.000000e+00> : vector<8xf32>
    %28 = vector.multi_reduction <add>, %27, %cst_8 [1] : vector<8x128xf32> to vector<8xf32>
    %29 = vector.shape_cast %28 : vector<8xf32> to vector<8x1xf32>
    %30 = arith.mulf %27, %4 : vector<8x128xf32>
    %cst_9 = arith.constant dense<0.000000e+00> : vector<8xf32>
    %31 = vector.multi_reduction <add>, %30, %cst_9 [1] : vector<8x128xf32> to vector<8xf32>
    %32 = vector.shape_cast %31 : vector<8xf32> to vector<8x1xf32>
    %cst_10 = arith.constant 1.000000e+00 : f32
    %33 = vector.broadcast %cst_10 : f32 to vector<8x1xf32>
    %34 = arith.subf %32, %33 : vector<8x1xf32>
    %35 = arith.divf %34, %29 : vector<8x1xf32>
    %36 = vector.broadcast %35 : vector<8x1xf32> to vector<8x128xf32>
    %37 = arith.subf %4, %36 : vector<8x128xf32>
    %cst_11 = arith.constant 0.000000e+00 : f32
    %38 = vector.broadcast %cst_11 : f32 to vector<8x128xf32>
    %39 = arith.maximumf %37, %38 : vector<8x128xf32>
    %40 = math.log %39 : vector<8x128xf32>
    %c0_12 = arith.constant 0 : index
    %c0_13 = arith.constant 0 : index
    %41 = vector.load %arg2[%c0_12, %c0_13] : memref<8x128xf32, #tpu.memory_space<vmem>>, vector<8x128xf32>
    tpu.vector_store %arg2[%c0_12, %c0_13], %40 {strides = array<i32>} : memref<8x128xf32, #tpu.memory_space<vmem>>, vector<8x128xf32>,
    return
  }
  func.func @transform_0(%arg0: i32) -> (i32, i32) {
    %c0_i32 = arith.constant 0 : i32
    %c0_i32_0 = arith.constant 0 : i32
    return %arg0, %c0_i32 : i32, i32
  }
  func.func @transform_1(%arg0: i32) -> (i32, i32) {
    %c0_i32 = arith.constant 0 : i32
    %c0_i32_0 = arith.constant 0 : i32
    return %arg0, %c0_i32 : i32, i32
  }
}

</mosaic_0001>

<llo_original>
// kernel: tpu_custom_call.1
$region0: #{tpu_custom_call.1}
  #allocation0 [shape = 'u32[]', space=smem, size = 0x4, offset = 0x4, fixed_abs, tag = 'smem constant byte address 0x4 - core index']
  #allocation1 [shape = 'u32[144,128]{1,0:T(1,128)}', space=vmem, size = 0x12000, scoped, tag = 'internal scratch']
  %s0 = inlined_call_operand.hbm [shape: f32[16,128], index: 0, kind: input, shape index: {}]
  %s1 = inlined_call_operand.hbm [shape: f32[16,128], index: 1, kind: output, shape index: {}]
  %s2 = sld [smem:[#allocation0]]
  $region41: #{tpu_custom_call.1} parent=0
    _
  %s4 = ssub.s32 1, %s2
  %s5 = scalar_select 0, %s4, %s2
  $region1: #{tpu_custom_call.1} parent=0
    #allocation2 [shape = 'u8[8192]{0}', space=vmem, size = 0x2000, scoped, tag = 'input window, operand 0']
    #allocation3 [shape = 's32[2]{0}', space=sflag, size = 0x8, scoped, tag = 'scoped memory for tpu_custom_call.1']
    #allocation4 [shape = 's32[2]{0}', space=sflag, size = 0x8, scoped, tag = 'scoped memory for tpu_custom_call.1']
    #allocation5 [shape = 'u8[8192]{0}', space=vmem, size = 0x2000, scoped, tag = 'output window, operand 0']
    %6 = vsyncpa [#allocation3], 0
    %s7 = scalar_lea.sflag [#allocation3], 1
    %8 = vsyncpa %s7, 0
    %9 = vsyncpa [#allocation4], 0
    %s10 = scalar_lea.sflag [#allocation4], 1
    %11 = vsyncpa %s10, 0
    loop: start=0, step=1, limit=4
    $region2: #{tpu_custom_call.1} parent=1 // loop_pre_header
      _
    $region3: #{tpu_custom_call.1} parent=1 // loop_header
      %s13 = sphi 0, %s17
      %p14 = scmp.ge.s32.totalorder %s13, 4
      %s23 = sphi 0, %s25
      %s26 = sphi 0, %s23
      %s27 = sphi 0, %s26
      %s43 = sphi 0, %s27
      %s49 = sphi 0, %s51
      %s52 = sphi 0, %s49
      %s53 = sphi 0, %s52
      %s69 = sphi 0, %s53
    $region4: #{tpu_custom_call.1} parent=1 // loop_header_branch
      %16 = sbr.rel (%p14) target = $region8
    $region5: #{tpu_custom_call.1} parent=1 // loop_body
      %s18 = ssub.s32 %s13, 1
      %s19 = ssub.s32 %s13, 2
      %s20 = sadd.s32 %s13, 1
      %s21 = ssub.s32 %s13, %s20
      %p22 = scmp.eq.s32.totalorder %s21, 0
      %s24 = sadd.s32 %s23, 1
      %s25 = scalar_select %p22, %s23, %s24
      %p28 = pneg %p22
      %p29 = scmp.eq.s32.totalorder %s13, 1
      %p30 = por %p28, %p29
      %p31 = scmp.ne.s32.totalorder %s23, %s26
      %p32 = scmp.eq.s32.totalorder %s13, 0
      %p33 = por %p31, %p32
      %p34 = scmp.ne.s32.totalorder %s23, %s26
      %p35 = scmp.eq.s32.totalorder %s18, 1
      %p36 = por %p34, %p35
      %p37 = scmp.ne.s32.totalorder %s26, %s27
      %p38 = scmp.eq.s32.totalorder %s18, 0
      %p39 = por %p37, %p38
      %p40 = scmp.ne.s32.totalorder %s26, %s27
      %p41 = scmp.eq.s32.totalorder %s19, 1
      %p42 = por %p40, %p41
      %p44 = scmp.ne.s32.totalorder %s27, %s43
      %p45 = scmp.eq.s32.totalorder %s19, 0
      %p46 = por %p44, %p45
      %s47 = ssub.s32 %s13, %s20
      %p48 = scmp.eq.s32.totalorder %s47, 0
      %s50 = sadd.s32 %s49, 1
      %s51 = scalar_select %p48, %s49, %s50
      %p54 = pneg %p48
      %p55 = scmp.eq.s32.totalorder %s13, 1
      %p56 = por %p54, %p55
      %p57 = scmp.ne.s32.totalorder %s49, %s52
      %p58 = scmp.eq.s32.totalorder %s13, 0
      %p59 = por %p57, %p58
      %p60 = scmp.ne.s32.totalorder %s49, %s52
      %p61 = scmp.eq.s32.totalorder %s18, 1
      %p62 = por %p60, %p61
      %p63 = scmp.ne.s32.totalorder %s52, %s53
      %p64 = scmp.eq.s32.totalorder %s18, 0
      %p65 = por %p63, %p64
      %p66 = scmp.ne.s32.totalorder %s52, %s53
      %p67 = scmp.eq.s32.totalorder %s19, 1
      %p68 = por %p66, %p67
      %p70 = scmp.ne.s32.totalorder %s53, %s69
      %p71 = scmp.eq.s32.totalorder %s19, 0
      %p72 = por %p70, %p71
      %p73 = scmp.le.s32.totalorder 1, %s13
      %p74 = scmp.lt.s32.totalorder %s13, 3
      %p75 = pnand %p73, %p74
      %p76 = pneg %p75
      // Predicated region
      $region9: #{tpu_custom_call.1} parent=5 // pred_check
        _
      $region10: #{tpu_custom_call.1} parent=5 // pred_check_branch
        %78 = sbr.rel (%p75) target = $region12
      $region11: #{tpu_custom_call.1} parent=5 // pred_region
        %s79 = ssub.s32 %s13, 1
      $region12: #{tpu_custom_call.1} parent=5 // pred_fallthru
        _
      %p80 = scmp.lt.s32.totalorder %s13, 2
      // Predicated region
      $region13: #{tpu_custom_call.1} parent=5 // pred_check
        %p81 = pneg %p80
      $region14: #{tpu_custom_call.1} parent=5 // pred_check_branch
        %83 = sbr.rel (%p81) target = $region16
      $region15: #{tpu_custom_call.1} parent=5 // pred_region
        // Predicated region
        $region17: #{tpu_custom_call.1} parent=15 // pred_check
          %p84 = pneg %p33
        $region18: #{tpu_custom_call.1} parent=15 // pred_check_branch
          %86 = sbr.rel (%p84) target = $region20
        $region19: #{tpu_custom_call.1} parent=15 // pred_region
          %s87 = sand.u32 %s23, 1
          %s88 = scalar_lea.sflag [#allocation3], %s87
          %s89 = sand.u32 %s23, 1
          %s90 = smul.addr %s89, 8
          %s91 = scalar_lea.vmem [#allocation2], %s90
          %s93 = ssub.s32 128, 128
          %94 = vsyncadd %s88, %s93
          %s95 = smul.addr %s13, 128
          %s96 = scalar_lea.hbm %s0, %s95
          %s98 = sshll.u32 %s91, 4
          %s99 = int_to_ptr.vmem [resolvable:$true] %s98
          %101 = dma.hbm_to_vmem [thread:$0]  %s96, 128, %s99, %s88
        $region20: #{tpu_custom_call.1} parent=15 // pred_fallthru
          _
      $region16: #{tpu_custom_call.1} parent=5 // pred_fallthru
        _
      %p102 = scmp.le.s32.totalorder 1, %s13
      %p103 = scmp.lt.s32.totalorder %s13, 3
      %p104 = pnand %p102, %p103
      %p105 = pneg %p104
      // Predicated region
      $region21: #{tpu_custom_call.1} parent=5 // pred_check
        _
      $region22: #{tpu_custom_call.1} parent=5 // pred_check_branch
        %107 = sbr.rel (%p104) target = $region24
      $region23: #{tpu_custom_call.1} parent=5 // pred_region
        %s108 = ssub.s32 %s13, 1
        %s109 = sand.u32 %s26, 1
        %s110 = scalar_lea.sflag [#allocation3], %s109
        %s111 = sand.u32 %s26, 1
        %s112 = smul.addr %s111, 8
        %s113 = scalar_lea.vmem [#allocation2], %s112
        // Predicated region
        $region25: #{tpu_custom_call.1} parent=23 // pred_check
          %p114 = pneg %p39
        $region26: #{tpu_custom_call.1} parent=23 // pred_check_branch
          %116 = sbr.rel (%p114) target = $region28
        $region27: #{tpu_custom_call.1} parent=23 // pred_region
          %117 = dma.done %s110, 128
        $region28: #{tpu_custom_call.1} parent=23 // pred_fallthru
          _
        %s118 = sand.u32 %s26, 1
        %s119 = scalar_lea.sflag [#allocation3], %s118
        %s120 = sand.u32 %s26, 1
        %s121 = smul.addr %s120, 8
        %s122 = scalar_lea.vmem [#allocation2], %s121
        %p123 = pneg %p39
        %p124 = pneg %p36
        %p125 = pneg %p65
        %p126 = pneg %p62
        %s127 = sand.u32 %s52, 1
        %s128 = scalar_lea.sflag [#allocation4], %s127
        %s129 = sand.u32 %s52, 1
        %s130 = smul.addr %s129, 8
        %s131 = scalar_lea.vmem [#allocation5], %s130
        %v132 = vld [vmem:[%s113] sm:$0xff]
        %133 = vmax.xlane.f32.xlu0 %v132
        %v134 = vpop.xlane.xlu0 %133
        %v135 = vsub.f32 %v132, %v134
        %v136 = vlaneseq
        %v137 = vshrl.u32 %v136, 7
        %v138 = vsub.s32 0, %v137
        %v139 = vrot.slane %v135, %v138
        %141 = vbcast.lane.b32.xlu0 %v139, 256
        %v142 = vpop.permute.xlu0 %141
        %s144 = sor.u32 256, 8
        %145 = vbcast.lane.b32.xlu0 %v139, %s144
        %v146 = vpop.permute.xlu0 %145
        %s148 = sor.u32 256, 16
        %149 = vbcast.lane.b32.xlu0 %v139, %s148
        %v150 = vpop.permute.xlu0 %149
        %s152 = sor.u32 256, 24
        %153 = vbcast.lane.b32.xlu0 %v139, %s152
        %v154 = vpop.permute.xlu0 %153
        %s156 = sor.u32 256, 32
        %157 = vbcast.lane.b32.xlu0 %v139, %s156
        %v158 = vpop.permute.xlu0 %157
        %s160 = sor.u32 256, 40
        %161 = vbcast.lane.b32.xlu0 %v139, %s160
        %v162 = vpop.permute.xlu0 %161
        %s164 = sor.u32 256, 48
        %165 = vbcast.lane.b32.xlu0 %v139, %s164
        %v166 = vpop.permute.xlu0 %165
        %s168 = sor.u32 256, 56
        %169 = vbcast.lane.b32.xlu0 %v139, %s168
        %v170 = vpop.permute.xlu0 %169
        %s172 = sor.u32 256, 64
        %173 = vbcast.lane.b32.xlu0 %v139, %s172
        %v174 = vpop.permute.xlu0 %173
        %s176 = sor.u32 256, 72
        %177 = vbcast.lane.b32.xlu0 %v139, %s176
        %v178 = vpop.permute.xlu0 %177
        %s180 = sor.u32 256, 80
        %181 = vbcast.lane.b32.xlu0 %v139, %s180
        %v182 = vpop.permute.xlu0 %181
        %s184 = sor.u32 256, 88
        %185 = vbcast.lane.b32.xlu0 %v139, %s184
        %v186 = vpop.permute.xlu0 %185
        %s188 = sor.u32 256, 96
        %189 = vbcast.lane.b32.xlu0 %v139, %s188
        %v190 = vpop.permute.xlu0 %189
        %s192 = sor.u32 256, 104
        %193 = vbcast.lane.b32.xlu0 %v139, %s192
        %v194 = vpop.permute.xlu0 %193
        %s196 = sor.u32 256, 112
        %197 = vbcast.lane.b32.xlu0 %v139, %s196
        %v198 = vpop.permute.xlu0 %197
        %s200 = sor.u32 256, 120
        %201 = vbcast.lane.b32.xlu0 %v139, %s200
        %v202 = vpop.permute.xlu0 %201
        %v203 = vlaneseq
        %v204 = vshrl.u32 %v203, 7
        %v205 = vsub.s32 1, %v204
        %v206 = vrot.slane %v135, %v205
        %208 = vbcast.lane.b32.xlu0 %v206, 256
        %v209 = vpop.permute.xlu0 %208
        %s211 = sor.u32 256, 8
        %212 = vbcast.lane.b32.xlu0 %v206, %s211
        %v213 = vpop.permute.xlu0 %212
        %s215 = sor.u32 256, 16
        %216 = vbcast.lane.b32.xlu0 %v206, %s215
        %v217 = vpop.permute.xlu0 %216
        %s219 = sor.u32 256, 24
        %220 = vbcast.lane.b32.xlu0 %v206, %s219
        %v221 = vpop.permute.xlu0 %220
        %s223 = sor.u32 256, 32
        %224 = vbcast.lane.b32.xlu0 %v206, %s223
        %v225 = vpop.permute.xlu0 %224
        %s227 = sor.u32 256, 40
        %228 = vbcast.lane.b32.xlu0 %v206, %s227
        %v229 = vpop.permute.xlu0 %228
        %s231 = sor.u32 256, 48
        %232 = vbcast.lane.b32.xlu0 %v206, %s231
        %v233 = vpop.permute.xlu0 %232
        %s235 = sor.u32 256, 56
        %236 = vbcast.lane.b32.xlu0 %v206, %s235
        %v237 = vpop.permute.xlu0 %236
        %s239 = sor.u32 256, 64
        %240 = vbcast.lane.b32.xlu0 %v206, %s239
        %v241 = vpop.permute.xlu0 %240
        %s243 = sor.u32 256, 72
        %244 = vbcast.lane.b32.xlu0 %v206, %s243
        %v245 = vpop.permute.xlu0 %244
        %s247 = sor.u32 256, 80
        %248 = vbcast.lane.b32.xlu0 %v206, %s247
        %v249 = vpop.permute.xlu0 %248
        %s251 = sor.u32 256, 88
        %252 = vbcast.lane.b32.xlu0 %v206, %s251
        %v253 = vpop.permute.xlu0 %252
        %s255 = sor.u32 256, 96
        %256 = vbcast.lane.b32.xlu0 %v206, %s255
        %v257 = vpop.permute.xlu0 %256
        %s259 = sor.u32 256, 104
        %260 = vbcast.lane.b32.xlu0 %v206, %s259
        %v261 = vpop.permute.xlu0 %260
        %s263 = sor.u32 256, 112
        %264 = vbcast.lane.b32.xlu0 %v206, %s263
        %v265 = vpop.permute.xlu0 %264
        %s267 = sor.u32 256, 120
        %268 = vbcast.lane.b32.xlu0 %v206, %s267
        %v269 = vpop.permute.xlu0 %268
        %v270 = vlaneseq
        %v271 = vshrl.u32 %v270, 7
        %v272 = vsub.s32 2, %v271
        %v273 = vrot.slane %v135, %v272
        %275 = vbcast.lane.b32.xlu0 %v273, 256
        %v276 = vpop.permute.xlu0 %275
        %s278 = sor.u32 256, 8
        %279 = vbcast.lane.b32.xlu0 %v273, %s278
        %v280 = vpop.permute.xlu0 %279
        %s282 = sor.u32 256, 16
        %283 = vbcast.lane.b32.xlu0 %v273, %s282
        %v284 = vpop.permute.xlu0 %283
        %s286 = sor.u32 256, 24
        %287 = vbcast.lane.b32.xlu0 %v273, %s286
        %v288 = vpop.permute.xlu0 %287
        %s290 = sor.u32 256, 32
        %291 = vbcast.lane.b32.xlu0 %v273, %s290
        %v292 = vpop.permute.xlu0 %291
        %s294 = sor.u32 256, 40
        %295 = vbcast.lane.b32.xlu0 %v273, %s294
        %v296 = vpop.permute.xlu0 %295
        %s298 = sor.u32 256, 48
        %299 = vbcast.lane.b32.xlu0 %v273, %s298
        %v300 = vpop.permute.xlu0 %299
        %s302 = sor.u32 256, 56
        %303 = vbcast.lane.b32.xlu0 %v273, %s302
        %v304 = vpop.permute.xlu0 %303
        %s306 = sor.u32 256, 64
        %307 = vbcast.lane.b32.xlu0 %v273, %s306
        %v308 = vpop.permute.xlu0 %307
        %s310 = sor.u32 256, 72
        %311 = vbcast.lane.b32.xlu0 %v273, %s310
        %v312 = vpop.permute.xlu0 %311
        %s314 = sor.u32 256, 80
        %315 = vbcast.lane.b32.xlu0 %v273, %s314
        %v316 = vpop.permute.xlu0 %315
        %s318 = sor.u32 256, 88
        %319 = vbcast.lane.b32.xlu0 %v273, %s318
        %v320 = vpop.permute.xlu0 %319
        %s322 = sor.u32 256, 96
        %323 = vbcast.lane.b32.xlu0 %v273, %s322
        %v324 = vpop.permute.xlu0 %323
        %s326 = sor.u32 256, 104
        %327 = vbcast.lane.b32.xlu0 %v273, %s326
        %v328 = vpop.permute.xlu0 %327
        %s330 = sor.u32 256, 112
        %331 = vbcast.lane.b32.xlu0 %v273, %s330
        %v332 = vpop.permute.xlu0 %331
        %s334 = sor.u32 256, 120
        %335 = vbcast.lane.b32.xlu0 %v273, %s334
        %v336 = vpop.permute.xlu0 %335
        %v337 = vlaneseq
        %v338 = vshrl.u32 %v337, 7
        %v339 = vsub.s32 3, %v338
        %v340 = vrot.slane %v135, %v339
        %342 = vbcast.lane.b32.xlu0 %v340, 256
        %v343 = vpop.permute.xlu0 %342
        %s345 = sor.u32 256, 8
        %346 = vbcast.lane.b32.xlu0 %v340, %s345
        %v347 = vpop.permute.xlu0 %346
        %s349 = sor.u32 256, 16
        %350 = vbcast.lane.b32.xlu0 %v340, %s349
        %v351 = vpop.permute.xlu0 %350
        %s353 = sor.u32 256, 24
        %354 = vbcast.lane.b32.xlu0 %v340, %s353
        %v355 = vpop.permute.xlu0 %354
        %s357 = sor.u32 256, 32
        %358 = vbcast.lane.b32.xlu0 %v340, %s357
        %v359 = vpop.permute.xlu0 %358
        %s361 = sor.u32 256, 40
        %362 = vbcast.lane.b32.xlu0 %v340, %s361
        %v363 = vpop.permute.xlu0 %362
        %s365 = sor.u32 256, 48
        %366 = vbcast.lane.b32.xlu0 %v340, %s365
        %v367 = vpop.permute.xlu0 %366
        %s369 = sor.u32 256, 56
        %370 = vbcast.lane.b32.xlu0 %v340, %s369
        %v371 = vpop.permute.xlu0 %370
        %s373 = sor.u32 256, 64
        %374 = vbcast.lane.b32.xlu0 %v340, %s373
        %v375 = vpop.permute.xlu0 %374
        %s377 = sor.u32 256, 72
        %378 = vbcast.lane.b32.xlu0 %v340, %s377
        %v379 = vpop.permute.xlu0 %378
        %s381 = sor.u32 256, 80
        %382 = vbcast.lane.b32.xlu0 %v340, %s381
        %v383 = vpop.permute.xlu0 %382
        %s385 = sor.u32 256, 88
        %386 = vbcast.lane.b32.xlu0 %v340, %s385
        %v387 = vpop.permute.xlu0 %386
        %s389 = sor.u32 256, 96
        %390 = vbcast.lane.b32.xlu0 %v340, %s389
        %v391 = vpop.permute.xlu0 %390
        %s393 = sor.u32 256, 104
        %394 = vbcast.lane.b32.xlu0 %v340, %s393
        %v395 = vpop.permute.xlu0 %394
        %s397 = sor.u32 256, 112
        %398 = vbcast.lane.b32.xlu0 %v340, %s397
        %v399 = vpop.permute.xlu0 %398
        %s401 = sor.u32 256, 120
        %402 = vbcast.lane.b32.xlu0 %v340, %s401
        %v403 = vpop.permute.xlu0 %402
        %v404 = vlaneseq
        %v405 = vshrl.u32 %v404, 7
        %v406 = vsub.s32 4, %v405
        %v407 = vrot.slane %v135, %v406
        %409 = vbcast.lane.b32.xlu0 %v407, 256
        %v410 = vpop.permute.xlu0 %409
        %s412 = sor.u32 256, 8
        %413 = vbcast.lane.b32.xlu0 %v407, %s412
        %v414 = vpop.permute.xlu0 %413
        %s416 = sor.u32 256, 16
        %417 = vbcast.lane.b32.xlu0 %v407, %s416
        %v418 = vpop.permute.xlu0 %417
        %s420 = sor.u32 256, 24
        %421 = vbcast.lane.b32.xlu0 %v407, %s420
        %v422 = vpop.permute.xlu0 %421
        %s424 = sor.u32 256, 32
        %425 = vbcast.lane.b32.xlu0 %v407, %s424
        %v426 = vpop.permute.xlu0 %425
        %s428 = sor.u32 256, 40
        %429 = vbcast.lane.b32.xlu0 %v407, %s428
        %v430 = vpop.permute.xlu0 %429
        %s432 = sor.u32 256, 48
        %433 = vbcast.lane.b32.xlu0 %v407, %s432
        %v434 = vpop.permute.xlu0 %433
        %s436 = sor.u32 256, 56
        %437 = vbcast.lane.b32.xlu0 %v407, %s436
        %v438 = vpop.permute.xlu0 %437
        %s440 = sor.u32 256, 64
        %441 = vbcast.lane.b32.xlu0 %v407, %s440
        %v442 = vpop.permute.xlu0 %441
        %s444 = sor.u32 256, 72
        %445 = vbcast.lane.b32.xlu0 %v407, %s444
        %v446 = vpop.permute.xlu0 %445
        %s448 = sor.u32 256, 80
        %449 = vbcast.lane.b32.xlu0 %v407, %s448
        %v450 = vpop.permute.xlu0 %449
        %s452 = sor.u32 256, 88
        %453 = vbcast.lane.b32.xlu0 %v407, %s452
        %v454 = vpop.permute.xlu0 %453
        %s456 = sor.u32 256, 96
        %457 = vbcast.lane.b32.xlu0 %v407, %s456
        %v458 = vpop.permute.xlu0 %457
        %s460 = sor.u32 256, 104
        %461 = vbcast.lane.b32.xlu0 %v407, %s460
        %v462 = vpop.permute.xlu0 %461
        %s464 = sor.u32 256, 112
        %465 = vbcast.lane.b32.xlu0 %v407, %s464
        %v466 = vpop.permute.xlu0 %465
        %s468 = sor.u32 256, 120
        %469 = vbcast.lane.b32.xlu0 %v407, %s468
        %v470 = vpop.permute.xlu0 %469
        %v471 = vlaneseq
        %v472 = vshrl.u32 %v471, 7
        %v473 = vsub.s32 5, %v472
        %v474 = vrot.slane %v135, %v473
        %476 = vbcast.lane.b32.xlu0 %v474, 256
        %v477 = vpop.permute.xlu0 %476
        %s479 = sor.u32 256, 8
        %480 = vbcast.lane.b32.xlu0 %v474, %s479
        %v481 = vpop.permute.xlu0 %480
        %s483 = sor.u32 256, 16
        %484 = vbcast.lane.b32.xlu0 %v474, %s483
        %v485 = vpop.permute.xlu0 %484
        %s487 = sor.u32 256, 24
        %488 = vbcast.lane.b32.xlu0 %v474, %s487
        %v489 = vpop.permute.xlu0 %488
        %s491 = sor.u32 256, 32
        %492 = vbcast.lane.b32.xlu0 %v474, %s491
        %v493 = vpop.permute.xlu0 %492
        %s495 = sor.u32 256, 40
        %496 = vbcast.lane.b32.xlu0 %v474, %s495
        %v497 = vpop.permute.xlu0 %496
        %s499 = sor.u32 256, 48
        %500 = vbcast.lane.b32.xlu0 %v474, %s499
        %v501 = vpop.permute.xlu0 %500
        %s503 = sor.u32 256, 56
        %504 = vbcast.lane.b32.xlu0 %v474, %s503
        %v505 = vpop.permute.xlu0 %504
        %s507 = sor.u32 256, 64
        %508 = vbcast.lane.b32.xlu0 %v474, %s507
        %v509 = vpop.permute.xlu0 %508
        %s511 = sor.u32 256, 72
        %512 = vbcast.lane.b32.xlu0 %v474, %s511
        %v513 = vpop.permute.xlu0 %512
        %s515 = sor.u32 256, 80
        %516 = vbcast.lane.b32.xlu0 %v474, %s515
        %v517 = vpop.permute.xlu0 %516
        %s519 = sor.u32 256, 88
        %520 = vbcast.lane.b32.xlu0 %v474, %s519
        %v521 = vpop.permute.xlu0 %520
        %s523 = sor.u32 256, 96
        %524 = vbcast.lane.b32.xlu0 %v474, %s523
        %v525 = vpop.permute.xlu0 %524
        %s527 = sor.u32 256, 104
        %528 = vbcast.lane.b32.xlu0 %v474, %s527
        %v529 = vpop.permute.xlu0 %528
        %s531 = sor.u32 256, 112
        %532 = vbcast.lane.b32.xlu0 %v474, %s531
        %v533 = vpop.permute.xlu0 %532
        %s535 = sor.u32 256, 120
        %536 = vbcast.lane.b32.xlu0 %v474, %s535
        %v537 = vpop.permute.xlu0 %536
        %v538 = vlaneseq
        %v539 = vshrl.u32 %v538, 7
        %v540 = vsub.s32 6, %v539
        %v541 = vrot.slane %v135, %v540
        %543 = vbcast.lane.b32.xlu0 %v541, 256
        %v544 = vpop.permute.xlu0 %543
        %s546 = sor.u32 256, 8
        %547 = vbcast.lane.b32.xlu0 %v541, %s546
        %v548 = vpop.permute.xlu0 %547
        %s550 = sor.u32 256, 16
        %551 = vbcast.lane.b32.xlu0 %v541, %s550
        %v552 = vpop.permute.xlu0 %551
        %s554 = sor.u32 256, 24
        %555 = vbcast.lane.b32.xlu0 %v541, %s554
        %v556 = vpop.permute.xlu0 %555
        %s558 = sor.u32 256, 32
        %559 = vbcast.lane.b32.xlu0 %v541, %s558
        %v560 = vpop.permute.xlu0 %559
        %s562 = sor.u32 256, 40
        %563 = vbcast.lane.b32.xlu0 %v541, %s562
        %v564 = vpop.permute.xlu0 %563
        %s566 = sor.u32 256, 48
        %567 = vbcast.lane.b32.xlu0 %v541, %s566
        %v568 = vpop.permute.xlu0 %567
        %s570 = sor.u32 256, 56
        %571 = vbcast.lane.b32.xlu0 %v541, %s570
        %v572 = vpop.permute.xlu0 %571
        %s574 = sor.u32 256, 64
        %575 = vbcast.lane.b32.xlu0 %v541, %s574
        %v576 = vpop.permute.xlu0 %575
        %s578 = sor.u32 256, 72
        %579 = vbcast.lane.b32.xlu0 %v541, %s578
        %v580 = vpop.permute.xlu0 %579
        %s582 = sor.u32 256, 80
        %583 = vbcast.lane.b32.xlu0 %v541, %s582
        %v584 = vpop.permute.xlu0 %583
        %s586 = sor.u32 256, 88
        %587 = vbcast.lane.b32.xlu0 %v541, %s586
        %v588 = vpop.permute.xlu0 %587
        %s590 = sor.u32 256, 96
        %591 = vbcast.lane.b32.xlu0 %v541, %s590
        %v592 = vpop.permute.xlu0 %591
        %s594 = sor.u32 256, 104
        %595 = vbcast.lane.b32.xlu0 %v541, %s594
        %v596 = vpop.permute.xlu0 %595
        %s598 = sor.u32 256, 112
        %599 = vbcast.lane.b32.xlu0 %v541, %s598
        %v600 = vpop.permute.xlu0 %599
        %s602 = sor.u32 256, 120
        %603 = vbcast.lane.b32.xlu0 %v541, %s602
        %v604 = vpop.permute.xlu0 %603
        %v605 = vlaneseq
        %v606 = vshrl.u32 %v605, 7
        %v607 = vsub.s32 7, %v606
        %v608 = vrot.slane %v135, %v607
        %610 = vbcast.lane.b32.xlu0 %v608, 256
        %v611 = vpop.permute.xlu0 %610
        %s613 = sor.u32 256, 8
        %614 = vbcast.lane.b32.xlu0 %v608, %s613
        %v615 = vpop.permute.xlu0 %614
        %s617 = sor.u32 256, 16
        %618 = vbcast.lane.b32.xlu0 %v608, %s617
        %v619 = vpop.permute.xlu0 %618
        %s621 = sor.u32 256, 24
        %622 = vbcast.lane.b32.xlu0 %v608, %s621
        %v623 = vpop.permute.xlu0 %622
        %s625 = sor.u32 256, 32
        %626 = vbcast.lane.b32.xlu0 %v608, %s625
        %v627 = vpop.permute.xlu0 %626
        %s629 = sor.u32 256, 40
        %630 = vbcast.lane.b32.xlu0 %v608, %s629
        %v631 = vpop.permute.xlu0 %630
        %s633 = sor.u32 256, 48
        %634 = vbcast.lane.b32.xlu0 %v608, %s633
        %v635 = vpop.permute.xlu0 %634
        %s637 = sor.u32 256, 56
        %638 = vbcast.lane.b32.xlu0 %v608, %s637
        %v639 = vpop.permute.xlu0 %638
        %s641 = sor.u32 256, 64
        %642 = vbcast.lane.b32.xlu0 %v608, %s641
        %v643 = vpop.permute.xlu0 %642
        %s645 = sor.u32 256, 72
        %646 = vbcast.lane.b32.xlu0 %v608, %s645
        %v647 = vpop.permute.xlu0 %646
        %s649 = sor.u32 256, 80
        %650 = vbcast.lane.b32.xlu0 %v608, %s649
        %v651 = vpop.permute.xlu0 %650
        %s653 = sor.u32 256, 88
        %654 = vbcast.lane.b32.xlu0 %v608, %s653
        %v655 = vpop.permute.xlu0 %654
        %s657 = sor.u32 256, 96
        %658 = vbcast.lane.b32.xlu0 %v608, %s657
        %v659 = vpop.permute.xlu0 %658
        %s661 = sor.u32 256, 104
        %662 = vbcast.lane.b32.xlu0 %v608, %s661
        %v663 = vpop.permute.xlu0 %662
        %s665 = sor.u32 256, 112
        %666 = vbcast.lane.b32.xlu0 %v608, %s665
        %v667 = vpop.permute.xlu0 %666
        %s669 = sor.u32 256, 120
        %670 = vbcast.lane.b32.xlu0 %v608, %s669
        %v671 = vpop.permute.xlu0 %670
        %v673 = vcombine.high %v135, %v135
        %v675 = vunpack.c.l.s4 1966171168
        %v676 = vunpack.c.0.s8 %v675
        %v677 = vlaneseq
        %v678 = vshrl.u32 %v677, 7
        %v679 = vsub.s32 %v676, %v678
        %v680 = vrot.slane %v135, %v679
        %v682 = vunpack.c.l.s4 1966171168
        %v683 = vunpack.c.0.s8 %v682
        %v684 = vlaneseq
        %v685 = vshrl.u32 %v684, 7
        %v686 = vsub.s32 %v683, %v685
        %v687 = vrot.slane %v673, %v686
        %v688 = vcombine.high %v680, %v680
        %v689 = vcombine.high %v687, %v687
        %v691 = vunpack.c.l.s4 1966171168
        %v692 = vunpack.c.0.s8 %v691
        %v693 = vlaneseq
        %v694 = vshrl.u32 %v693, 7
        %v695 = vsub.s32 %v692, %v694
        %v696 = vrot.slane %v680, %v695
        %v698 = vunpack.c.l.s4 1966171168
        %v699 = vunpack.c.0.s8 %v698
        %v700 = vlaneseq
        %v701 = vshrl.u32 %v700, 7
        %v702 = vsub.s32 %v699, %v701
        %v703 = vrot.slane %v687, %v702
        %v705 = vunpack.c.l.s4 1966171168
        %v706 = vunpack.c.0.s8 %v705
        %v707 = vlaneseq
        %v708 = vshrl.u32 %v707, 7
        %v709 = vsub.s32 %v706, %v708
        %v710 = vrot.slane %v688, %v709
        %v712 = vunpack.c.l.s4 1966171168
        %v713 = vunpack.c.0.s8 %v712
        %v714 = vlaneseq
        %v715 = vshrl.u32 %v714, 7
        %v716 = vsub.s32 %v713, %v715
        %v717 = vrot.slane %v689, %v716
        %v718 = vcombine.high %v696, %v696
        %v719 = vcombine.high %v703, %v703
        %v720 = vcombine.high %v710, %v710
        %v721 = vcombine.high %v717, %v717
        %v722 = vlaneseq
        %v723 = vshrl.u32 %v722, 7
        %v724 = vsub.s32 0, %v723
        %v725 = vrot.slane %v696, %v724
        %v726 = vlaneseq
        %v727 = vshrl.u32 %v726, 7
        %v728 = vsub.s32 0, %v727
        %v729 = vrot.slane %v710, %v728
        %v730 = vlaneseq
        %v731 = vshrl.u32 %v730, 7
        %v732 = vsub.s32 0, %v731
        %v733 = vrot.slane %v718, %v732
        %v734 = vlaneseq
        %v735 = vshrl.u32 %v734, 7
        %v736 = vsub.s32 0, %v735
        %v737 = vrot.slane %v720, %v736
        %v738 = vlaneseq
        %v739 = vshrl.u32 %v738, 7
        %v740 = vsub.s32 0, %v739
        %v741 = vrot.slane %v703, %v740
        %v742 = vlaneseq
        %v743 = vshrl.u32 %v742, 7
        %v744 = vsub.s32 0, %v743
        %v745 = vrot.slane %v717, %v744
        %v746 = vlaneseq
        %v747 = vshrl.u32 %v746, 7
        %v748 = vsub.s32 0, %v747
        %v749 = vrot.slane %v719, %v748
        %v750 = vlaneseq
        %v751 = vshrl.u32 %v750, 7
        %v752 = vsub.s32 0, %v751
        %v753 = vrot.slane %v721, %v752
        %vm762 = vcmp.gt.f32.partialorder %v142, %v725
        %vm763 = vcmp.gt.f32.partialorder %v146, %v725
        %vm764 = vcmp.gt.f32.partialorder %v150, %v725
        %vm765 = vcmp.gt.f32.partialorder %v154, %v725
        %vm766 = vcmp.gt.f32.partialorder %v158, %v725
        %vm767 = vcmp.gt.f32.partialorder %v162, %v725
        %vm768 = vcmp.gt.f32.partialorder %v166, %v725
        %vm769 = vcmp.gt.f32.partialorder %v170, %v725
        %vm770 = vcmp.gt.f32.partialorder %v174, %v725
        %vm771 = vcmp.gt.f32.partialorder %v178, %v725
        %vm772 = vcmp.gt.f32.partialorder %v182, %v725
        %vm773 = vcmp.gt.f32.partialorder %v186, %v725
        %vm774 = vcmp.gt.f32.partialorder %v190, %v725
        %vm775 = vcmp.gt.f32.partialorder %v194, %v725
        %vm776 = vcmp.gt.f32.partialorder %v198, %v725
        %vm777 = vcmp.gt.f32.partialorder %v202, %v725
        %vm778 = vcmp.gt.f32.partialorder %v209, %v729
        %vm779 = vcmp.gt.f32.partialorder %v213, %v729
        %vm780 = vcmp.gt.f32.partialorder %v217, %v729
        %vm781 = vcmp.gt.f32.partialorder %v221, %v729
        %vm782 = vcmp.gt.f32.partialorder %v225, %v729
        %vm783 = vcmp.gt.f32.partialorder %v229, %v729
        %vm784 = vcmp.gt.f32.partialorder %v233, %v729
        %vm785 = vcmp.gt.f32.partialorder %v237, %v729
        %vm786 = vcmp.gt.f32.partialorder %v241, %v729
        %vm787 = vcmp.gt.f32.partialorder %v245, %v729
        %vm788 = vcmp.gt.f32.partialorder %v249, %v729
        %vm789 = vcmp.gt.f32.partialorder %v253, %v729
        %vm790 = vcmp.gt.f32.partialorder %v257, %v729
        %vm791 = vcmp.gt.f32.partialorder %v261, %v729
        %vm792 = vcmp.gt.f32.partialorder %v265, %v729
        %vm793 = vcmp.gt.f32.partialorder %v269, %v729
        %vm794 = vcmp.gt.f32.partialorder %v276, %v733
        %vm795 = vcmp.gt.f32.partialorder %v280, %v733
        %vm796 = vcmp.gt.f32.partialorder %v284, %v733
        %vm797 = vcmp.gt.f32.partialorder %v288, %v733
        %vm798 = vcmp.gt.f32.partialorder %v292, %v733
        %vm799 = vcmp.gt.f32.partialorder %v296, %v733
        %vm800 = vcmp.gt.f32.partialorder %v300, %v733
        %vm801 = vcmp.gt.f32.partialorder %v304, %v733
        %vm802 = vcmp.gt.f32.partialorder %v308, %v733
        %vm803 = vcmp.gt.f32.partialorder %v312, %v733
        %vm804 = vcmp.gt.f32.partialorder %v316, %v733
        %vm805 = vcmp.gt.f32.partialorder %v320, %v733
        %vm806 = vcmp.gt.f32.partialorder %v324, %v733
        %vm807 = vcmp.gt.f32.partialorder %v328, %v733
        %vm808 = vcmp.gt.f32.partialorder %v332, %v733
        %vm809 = vcmp.gt.f32.partialorder %v336, %v733
        %vm810 = vcmp.gt.f32.partialorder %v343, %v737
        %vm811 = vcmp.gt.f32.partialorder %v347, %v737
        %vm812 = vcmp.gt.f32.partialorder %v351, %v737
        %vm813 = vcmp.gt.f32.partialorder %v355, %v737
        %vm814 = vcmp.gt.f32.partialorder %v359, %v737
        %vm815 = vcmp.gt.f32.partialorder %v363, %v737
        %vm816 = vcmp.gt.f32.partialorder %v367, %v737
        %vm817 = vcmp.gt.f32.partialorder %v371, %v737
        %vm818 = vcmp.gt.f32.partialorder %v375, %v737
        %vm819 = vcmp.gt.f32.partialorder %v379, %v737
        %vm820 = vcmp.gt.f32.partialorder %v383, %v737
        %vm821 = vcmp.gt.f32.partialorder %v387, %v737
        %vm822 = vcmp.gt.f32.partialorder %v391, %v737
        %vm823 = vcmp.gt.f32.partialorder %v395, %v737
        %vm824 = vcmp.gt.f32.partialorder %v399, %v737
        %vm825 = vcmp.gt.f32.partialorder %v403, %v737
        %vm826 = vcmp.gt.f32.partialorder %v410, %v741
        %vm827 = vcmp.gt.f32.partialorder %v414, %v741
        %vm828 = vcmp.gt.f32.partialorder %v418, %v741
        %vm829 = vcmp.gt.f32.partialorder %v422, %v741
        %vm830 = vcmp.gt.f32.partialorder %v426, %v741
        %vm831 = vcmp.gt.f32.partialorder %v430, %v741
        %vm832 = vcmp.gt.f32.partialorder %v434, %v741
        %vm833 = vcmp.gt.f32.partialorder %v438, %v741
        %vm834 = vcmp.gt.f32.partialorder %v442, %v741
        %vm835 = vcmp.gt.f32.partialorder %v446, %v741
        %vm836 = vcmp.gt.f32.partialorder %v450, %v741
        %vm837 = vcmp.gt.f32.partialorder %v454, %v741
        %vm838 = vcmp.gt.f32.partialorder %v458, %v741
        %vm839 = vcmp.gt.f32.partialorder %v462, %v741
        %vm840 = vcmp.gt.f32.partialorder %v466, %v741
        %vm841 = vcmp.gt.f32.partialorder %v470, %v741
        %vm842 = vcmp.gt.f32.partialorder %v477, %v745
        %vm843 = vcmp.gt.f32.partialorder %v481, %v745
        %vm844 = vcmp.gt.f32.partialorder %v485, %v745
        %vm845 = vcmp.gt.f32.partialorder %v489, %v745
        %vm846 = vcmp.gt.f32.partialorder %v493, %v745
        %vm847 = vcmp.gt.f32.partialorder %v497, %v745
        %vm848 = vcmp.gt.f32.partialorder %v501, %v745
        %vm849 = vcmp.gt.f32.partialorder %v505, %v745
        %vm850 = vcmp.gt.f32.partialorder %v509, %v745
        %vm851 = vcmp.gt.f32.partialorder %v513, %v745
        %vm852 = vcmp.gt.f32.partialorder %v517, %v745
        %vm853 = vcmp.gt.f32.partialorder %v521, %v745
        %vm854 = vcmp.gt.f32.partialorder %v525, %v745
        %vm855 = vcmp.gt.f32.partialorder %v529, %v745
        %vm856 = vcmp.gt.f32.partialorder %v533, %v745
        %vm857 = vcmp.gt.f32.partialorder %v537, %v745
        %vm858 = vcmp.gt.f32.partialorder %v544, %v749
        %vm859 = vcmp.gt.f32.partialorder %v548, %v749
        %vm860 = vcmp.gt.f32.partialorder %v552, %v749
        %vm861 = vcmp.gt.f32.partialorder %v556, %v749
        %vm862 = vcmp.gt.f32.partialorder %v560, %v749
        %vm863 = vcmp.gt.f32.partialorder %v564, %v749
        %vm864 = vcmp.gt.f32.partialorder %v568, %v749
        %vm865 = vcmp.gt.f32.partialorder %v572, %v749
        %vm866 = vcmp.gt.f32.partialorder %v576, %v749
        %vm867 = vcmp.gt.f32.partialorder %v580, %v749
        %vm868 = vcmp.gt.f32.partialorder %v584, %v749
        %vm869 = vcmp.gt.f32.partialorder %v588, %v749
        %vm870 = vcmp.gt.f32.partialorder %v592, %v749
        %vm871 = vcmp.gt.f32.partialorder %v596, %v749
        %vm872 = vcmp.gt.f32.partialorder %v600, %v749
        %vm873 = vcmp.gt.f32.partialorder %v604, %v749
        %vm874 = vcmp.gt.f32.partialorder %v611, %v753
        %vm875 = vcmp.gt.f32.partialorder %v615, %v753
        %vm876 = vcmp.gt.f32.partialorder %v619, %v753
        %vm877 = vcmp.gt.f32.partialorder %v623, %v753
        %vm878 = vcmp.gt.f32.partialorder %v627, %v753
        %vm879 = vcmp.gt.f32.partialorder %v631, %v753
        %vm880 = vcmp.gt.f32.partialorder %v635, %v753
        %vm881 = vcmp.gt.f32.partialorder %v639, %v753
        %vm882 = vcmp.gt.f32.partialorder %v643, %v753
        %vm883 = vcmp.gt.f32.partialorder %v647, %v753
        %vm884 = vcmp.gt.f32.partialorder %v651, %v753
        %vm885 = vcmp.gt.f32.partialorder %v655, %v753
        %vm886 = vcmp.gt.f32.partialorder %v659, %v753
        %vm887 = vcmp.gt.f32.partialorder %v663, %v753
        %vm888 = vcmp.gt.f32.partialorder %v667, %v753
        %vm889 = vcmp.gt.f32.partialorder %v671, %v753
        %v890 = vsel %vm762, 1.0, 0.0
        %v891 = vsel %vm763, 1.0, 0.0
        %v892 = vsel %vm764, 1.0, 0.0
        %v893 = vsel %vm765, 1.0, 0.0
        %v894 = vsel %vm766, 1.0, 0.0
        %v895 = vsel %vm767, 1.0, 0.0
        %v896 = vsel %vm768, 1.0, 0.0
        %v897 = vsel %vm769, 1.0, 0.0
        %v898 = vsel %vm770, 1.0, 0.0
        %v899 = vsel %vm771, 1.0, 0.0
        %v900 = vsel %vm772, 1.0, 0.0
        %v901 = vsel %vm773, 1.0, 0.0
        %v902 = vsel %vm774, 1.0, 0.0
        %v903 = vsel %vm775, 1.0, 0.0
        %v904 = vsel %vm776, 1.0, 0.0
        %v905 = vsel %vm777, 1.0, 0.0
        %v906 = vsel %vm778, 1.0, 0.0
        %v907 = vsel %vm779, 1.0, 0.0
        %v908 = vsel %vm780, 1.0, 0.0
        %v909 = vsel %vm781, 1.0, 0.0
        %v910 = vsel %vm782, 1.0, 0.0
        %v911 = vsel %vm783, 1.0, 0.0
        %v912 = vsel %vm784, 1.0, 0.0
        %v913 = vsel %vm785, 1.0, 0.0
        %v914 = vsel %vm786, 1.0, 0.0
        %v915 = vsel %vm787, 1.0, 0.0
        %v916 = vsel %vm788, 1.0, 0.0
        %v917 = vsel %vm789, 1.0, 0.0
        %v918 = vsel %vm790, 1.0, 0.0
        %v919 = vsel %vm791, 1.0, 0.0
        %v920 = vsel %vm792, 1.0, 0.0
        %v921 = vsel %vm793, 1.0, 0.0
        %v922 = vsel %vm794, 1.0, 0.0
        %v923 = vsel %vm795, 1.0, 0.0
        %v924 = vsel %vm796, 1.0, 0.0
        %v925 = vsel %vm797, 1.0, 0.0
        %v926 = vsel %vm798, 1.0, 0.0
        %v927 = vsel %vm799, 1.0, 0.0
        %v928 = vsel %vm800, 1.0, 0.0
        %v929 = vsel %vm801, 1.0, 0.0
        %v930 = vsel %vm802, 1.0, 0.0
        %v931 = vsel %vm803, 1.0, 0.0
        %v932 = vsel %vm804, 1.0, 0.0
        %v933 = vsel %vm805, 1.0, 0.0
        %v934 = vsel %vm806, 1.0, 0.0
        %v935 = vsel %vm807, 1.0, 0.0
        %v936 = vsel %vm808, 1.0, 0.0
        %v937 = vsel %vm809, 1.0, 0.0
        %v938 = vsel %vm810, 1.0, 0.0
        %v939 = vsel %vm811, 1.0, 0.0
        %v940 = vsel %vm812, 1.0, 0.0
        %v941 = vsel %vm813, 1.0, 0.0
        %v942 = vsel %vm814, 1.0, 0.0
        %v943 = vsel %vm815, 1.0, 0.0
        %v944 = vsel %vm816, 1.0, 0.0
        %v945 = vsel %vm817, 1.0, 0.0
        %v946 = vsel %vm818, 1.0, 0.0
        %v947 = vsel %vm819, 1.0, 0.0
        %v948 = vsel %vm820, 1.0, 0.0
        %v949 = vsel %vm821, 1.0, 0.0
        %v950 = vsel %vm822, 1.0, 0.0
        %v951 = vsel %vm823, 1.0, 0.0
        %v952 = vsel %vm824, 1.0, 0.0
        %v953 = vsel %vm825, 1.0, 0.0
        %v954 = vsel %vm826, 1.0, 0.0
        %v955 = vsel %vm827, 1.0, 0.0
        %v956 = vsel %vm828, 1.0, 0.0
        %v957 = vsel %vm829, 1.0, 0.0
        %v958 = vsel %vm830, 1.0, 0.0
        %v959 = vsel %vm831, 1.0, 0.0
        %v960 = vsel %vm832, 1.0, 0.0
        %v961 = vsel %vm833, 1.0, 0.0
        %v962 = vsel %vm834, 1.0, 0.0
        %v963 = vsel %vm835, 1.0, 0.0
        %v964 = vsel %vm836, 1.0, 0.0
        %v965 = vsel %vm837, 1.0, 0.0
        %v966 = vsel %vm838, 1.0, 0.0
        %v967 = vsel %vm839, 1.0, 0.0
        %v968 = vsel %vm840, 1.0, 0.0
        %v969 = vsel %vm841, 1.0, 0.0
        %v970 = vsel %vm842, 1.0, 0.0
        %v971 = vsel %vm843, 1.0, 0.0
        %v972 = vsel %vm844, 1.0, 0.0
        %v973 = vsel %vm845, 1.0, 0.0
        %v974 = vsel %vm846, 1.0, 0.0
        %v975 = vsel %vm847, 1.0, 0.0
        %v976 = vsel %vm848, 1.0, 0.0
        %v977 = vsel %vm849, 1.0, 0.0
        %v978 = vsel %vm850, 1.0, 0.0
        %v979 = vsel %vm851, 1.0, 0.0
        %v980 = vsel %vm852, 1.0, 0.0
        %v981 = vsel %vm853, 1.0, 0.0
        %v982 = vsel %vm854, 1.0, 0.0
        %v983 = vsel %vm855, 1.0, 0.0
        %v984 = vsel %vm856, 1.0, 0.0
        %v985 = vsel %vm857, 1.0, 0.0
        %v986 = vsel %vm858, 1.0, 0.0
        %v987 = vsel %vm859, 1.0, 0.0
        %v988 = vsel %vm860, 1.0, 0.0
        %v989 = vsel %vm861, 1.0, 0.0
        %v990 = vsel %vm862, 1.0, 0.0
        %v991 = vsel %vm863, 1.0, 0.0
        %v992 = vsel %vm864, 1.0, 0.0
        %v993 = vsel %vm865, 1.0, 0.0
        %v994 = vsel %vm866, 1.0, 0.0
        %v995 = vsel %vm867, 1.0, 0.0
        %v996 = vsel %vm868, 1.0, 0.0
        %v997 = vsel %vm869, 1.0, 0.0
        %v998 = vsel %vm870, 1.0, 0.0
        %v999 = vsel %vm871, 1.0, 0.0
        %v1000 = vsel %vm872, 1.0, 0.0
        %v1001 = vsel %vm873, 1.0, 0.0
        %v1002 = vsel %vm874, 1.0, 0.0
        %v1003 = vsel %vm875, 1.0, 0.0
        %v1004 = vsel %vm876, 1.0, 0.0
        %v1005 = vsel %vm877, 1.0, 0.0
        %v1006 = vsel %vm878, 1.0, 0.0
        %v1007 = vsel %vm879, 1.0, 0.0
        %v1008 = vsel %vm880, 1.0, 0.0
        %v1009 = vsel %vm881, 1.0, 0.0
        %v1010 = vsel %vm882, 1.0, 0.0
        %v1011 = vsel %vm883, 1.0, 0.0
        %v1012 = vsel %vm884, 1.0, 0.0
        %v1013 = vsel %vm885, 1.0, 0.0
        %v1014 = vsel %vm886, 1.0, 0.0
        %v1015 = vsel %vm887, 1.0, 0.0
        %v1016 = vsel %vm888, 1.0, 0.0
        %v1017 = vsel %vm889, 1.0, 0.0
        %v1018 = vadd.f32 %v890, %v891
        %v1019 = vadd.f32 %v1018, %v892
        %v1020 = vadd.f32 %v1019, %v893
        %v1021 = vadd.f32 %v1020, %v894
        %v1022 = vadd.f32 %v1021, %v895
        %v1023 = vadd.f32 %v1022, %v896
        %v1024 = vadd.f32 %v1023, %v897
        %v1025 = vadd.f32 %v1024, %v898
        %v1026 = vadd.f32 %v1025, %v899
        %v1027 = vadd.f32 %v1026, %v900
        %v1028 = vadd.f32 %v1027, %v901
        %v1029 = vadd.f32 %v1028, %v902
        %v1030 = vadd.f32 %v1029, %v903
        %v1031 = vadd.f32 %v1030, %v904
        %v1032 = vadd.f32 %v1031, %v905
        %v1033 = vrot.slane %v1032, 4
        %v1034 = vadd.f32 %v1032, %v1033
        %v1035 = vrot.slane %v1034, 2
        %v1036 = vadd.f32 %v1034, %v1035
        %v1037 = vrot.slane %v1036, 1
        %v1038 = vadd.f32 %v1036, %v1037
        %v1039 = vadd.f32 %v906, %v907
        %v1040 = vadd.f32 %v1039, %v908
        %v1041 = vadd.f32 %v1040, %v909
        %v1042 = vadd.f32 %v1041, %v910
        %v1043 = vadd.f32 %v1042, %v911
        %v1044 = vadd.f32 %v1043, %v912
        %v1045 = vadd.f32 %v1044, %v913
        %v1046 = vadd.f32 %v1045, %v914
        %v1047 = vadd.f32 %v1046, %v915
        %v1048 = vadd.f32 %v1047, %v916
        %v1049 = vadd.f32 %v1048, %v917
        %v1050 = vadd.f32 %v1049, %v918
        %v1051 = vadd.f32 %v1050, %v919
        %v1052 = vadd.f32 %v1051, %v920
        %v1053 = vadd.f32 %v1052, %v921
        %v1054 = vrot.slane %v1053, 4
        %v1055 = vadd.f32 %v1053, %v1054
        %v1056 = vrot.slane %v1055, 2
        %v1057 = vadd.f32 %v1055, %v1056
        %v1058 = vrot.slane %v1057, 1
        %v1059 = vadd.f32 %v1057, %v1058
        %v1060 = vadd.f32 %v922, %v923
        %v1061 = vadd.f32 %v1060, %v924
        %v1062 = vadd.f32 %v1061, %v925
        %v1063 = vadd.f32 %v1062, %v926
        %v1064 = vadd.f32 %v1063, %v927
        %v1065 = vadd.f32 %v1064, %v928
        %v1066 = vadd.f32 %v1065, %v929
        %v1067 = vadd.f32 %v1066, %v930
        %v1068 = vadd.f32 %v1067, %v931
        %v1069 = vadd.f32 %v1068, %v932
        %v1070 = vadd.f32 %v1069, %v933
        %v1071 = vadd.f32 %v1070, %v934
        %v1072 = vadd.f32 %v1071, %v935
        %v1073 = vadd.f32 %v1072, %v936
        %v1074 = vadd.f32 %v1073, %v937
        %v1075 = vrot.slane %v1074, 4
        %v1076 = vadd.f32 %v1074, %v1075
        %v1077 = vrot.slane %v1076, 2
        %v1078 = vadd.f32 %v1076, %v1077
        %v1079 = vrot.slane %v1078, 1
        %v1080 = vadd.f32 %v1078, %v1079
        %v1081 = vadd.f32 %v938, %v939
        %v1082 = vadd.f32 %v1081, %v940
        %v1083 = vadd.f32 %v1082, %v941
        %v1084 = vadd.f32 %v1083, %v942
        %v1085 = vadd.f32 %v1084, %v943
        %v1086 = vadd.f32 %v1085, %v944
        %v1087 = vadd.f32 %v1086, %v945
        %v1088 = vadd.f32 %v1087, %v946
        %v1089 = vadd.f32 %v1088, %v947
        %v1090 = vadd.f32 %v1089, %v948
        %v1091 = vadd.f32 %v1090, %v949
        %v1092 = vadd.f32 %v1091, %v950
        %v1093 = vadd.f32 %v1092, %v951
        %v1094 = vadd.f32 %v1093, %v952
        %v1095 = vadd.f32 %v1094, %v953
        %v1096 = vrot.slane %v1095, 4
        %v1097 = vadd.f32 %v1095, %v1096
        %v1098 = vrot.slane %v1097, 2
        %v1099 = vadd.f32 %v1097, %v1098
        %v1100 = vrot.slane %v1099, 1
        %v1101 = vadd.f32 %v1099, %v1100
        %v1102 = vadd.f32 %v954, %v955
        %v1103 = vadd.f32 %v1102, %v956
        %v1104 = vadd.f32 %v1103, %v957
        %v1105 = vadd.f32 %v1104, %v958
        %v1106 = vadd.f32 %v1105, %v959
        %v1107 = vadd.f32 %v1106, %v960
        %v1108 = vadd.f32 %v1107, %v961
        %v1109 = vadd.f32 %v1108, %v962
        %v1110 = vadd.f32 %v1109, %v963
        %v1111 = vadd.f32 %v1110, %v964
        %v1112 = vadd.f32 %v1111, %v965
        %v1113 = vadd.f32 %v1112, %v966
        %v1114 = vadd.f32 %v1113, %v967
        %v1115 = vadd.f32 %v1114, %v968
        %v1116 = vadd.f32 %v1115, %v969
        %v1117 = vrot.slane %v1116, 4
        %v1118 = vadd.f32 %v1116, %v1117
        %v1119 = vrot.slane %v1118, 2
        %v1120 = vadd.f32 %v1118, %v1119
        %v1121 = vrot.slane %v1120, 1
        %v1122 = vadd.f32 %v1120, %v1121
        %v1123 = vadd.f32 %v970, %v971
        %v1124 = vadd.f32 %v1123, %v972
        %v1125 = vadd.f32 %v1124, %v973
        %v1126 = vadd.f32 %v1125, %v974
        %v1127 = vadd.f32 %v1126, %v975
        %v1128 = vadd.f32 %v1127, %v976
        %v1129 = vadd.f32 %v1128, %v977
        %v1130 = vadd.f32 %v1129, %v978
        %v1131 = vadd.f32 %v1130, %v979
        %v1132 = vadd.f32 %v1131, %v980
        %v1133 = vadd.f32 %v1132, %v981
        %v1134 = vadd.f32 %v1133, %v982
        %v1135 = vadd.f32 %v1134, %v983
        %v1136 = vadd.f32 %v1135, %v984
        %v1137 = vadd.f32 %v1136, %v985
        %v1138 = vrot.slane %v1137, 4
        %v1139 = vadd.f32 %v1137, %v1138
        %v1140 = vrot.slane %v1139, 2
        %v1141 = vadd.f32 %v1139, %v1140
        %v1142 = vrot.slane %v1141, 1
        %v1143 = vadd.f32 %v1141, %v1142
        %v1144 = vadd.f32 %v986, %v987
        %v1145 = vadd.f32 %v1144, %v988
        %v1146 = vadd.f32 %v1145, %v989
        %v1147 = vadd.f32 %v1146, %v990
        %v1148 = vadd.f32 %v1147, %v991
        %v1149 = vadd.f32 %v1148, %v992
        %v1150 = vadd.f32 %v1149, %v993
        %v1151 = vadd.f32 %v1150, %v994
        %v1152 = vadd.f32 %v1151, %v995
        %v1153 = vadd.f32 %v1152, %v996
        %v1154 = vadd.f32 %v1153, %v997
        %v1155 = vadd.f32 %v1154, %v998
        %v1156 = vadd.f32 %v1155, %v999
        %v1157 = vadd.f32 %v1156, %v1000
        %v1158 = vadd.f32 %v1157, %v1001
        %v1159 = vrot.slane %v1158, 4
        %v1160 = vadd.f32 %v1158, %v1159
        %v1161 = vrot.slane %v1160, 2
        %v1162 = vadd.f32 %v1160, %v1161
        %v1163 = vrot.slane %v1162, 1
        %v1164 = vadd.f32 %v1162, %v1163
        %v1165 = vadd.f32 %v1002, %v1003
        %v1166 = vadd.f32 %v1165, %v1004
        %v1167 = vadd.f32 %v1166, %v1005
        %v1168 = vadd.f32 %v1167, %v1006
        %v1169 = vadd.f32 %v1168, %v1007
        %v1170 = vadd.f32 %v1169, %v1008
        %v1171 = vadd.f32 %v1170, %v1009
        %v1172 = vadd.f32 %v1171, %v1010
        %v1173 = vadd.f32 %v1172, %v1011
        %v1174 = vadd.f32 %v1173, %v1012
        %v1175 = vadd.f32 %v1174, %v1013
        %v1176 = vadd.f32 %v1175, %v1014
        %v1177 = vadd.f32 %v1176, %v1015
        %v1178 = vadd.f32 %v1177, %v1016
        %v1179 = vadd.f32 %v1178, %v1017
        %v1180 = vrot.slane %v1179, 4
        %v1181 = vadd.f32 %v1179, %v1180
        %v1182 = vrot.slane %v1181, 2
        %v1183 = vadd.f32 %v1181, %v1182
        %v1184 = vrot.slane %v1183, 1
        %v1185 = vadd.f32 %v1183, %v1184
        %v1186 = vadd.f32 %v1038, 0.0
        %v1187 = vadd.f32 %v1059, 0.0
        %v1188 = vadd.f32 %v1080, 0.0
        %v1189 = vadd.f32 %v1101, 0.0
        %v1190 = vadd.f32 %v1122, 0.0
        %v1191 = vadd.f32 %v1143, 0.0
        %v1192 = vadd.f32 %v1164, 0.0
        %v1193 = vadd.f32 %v1185, 0.0
        %v1194 = vmul.f32 %v890, %v142
        %v1195 = vmul.f32 %v891, %v146
        %v1196 = vmul.f32 %v892, %v150
        %v1197 = vmul.f32 %v893, %v154
        %v1198 = vmul.f32 %v894, %v158
        %v1199 = vmul.f32 %v895, %v162
        %v1200 = vmul.f32 %v896, %v166
        %v1201 = vmul.f32 %v897, %v170
        %v1202 = vmul.f32 %v898, %v174
        %v1203 = vmul.f32 %v899, %v178
        %v1204 = vmul.f32 %v900, %v182
        %v1205 = vmul.f32 %v901, %v186
        %v1206 = vmul.f32 %v902, %v190
        %v1207 = vmul.f32 %v903, %v194
        %v1208 = vmul.f32 %v904, %v198
        %v1209 = vmul.f32 %v905, %v202
        %v1210 = vmul.f32 %v906, %v209
        %v1211 = vmul.f32 %v907, %v213
        %v1212 = vmul.f32 %v908, %v217
        %v1213 = vmul.f32 %v909, %v221
        %v1214 = vmul.f32 %v910, %v225
        %v1215 = vmul.f32 %v911, %v229
        %v1216 = vmul.f32 %v912, %v233
        %v1217 = vmul.f32 %v913, %v237
        %v1218 = vmul.f32 %v914, %v241
        %v1219 = vmul.f32 %v915, %v245
        %v1220 = vmul.f32 %v916, %v249
        %v1221 = vmul.f32 %v917, %v253
        %v1222 = vmul.f32 %v918, %v257
        %v1223 = vmul.f32 %v919, %v261
        %v1224 = vmul.f32 %v920, %v265
        %v1225 = vmul.f32 %v921, %v269
        %v1226 = vmul.f32 %v922, %v276
        %v1227 = vmul.f32 %v923, %v280
        %v1228 = vmul.f32 %v924, %v284
        %v1229 = vmul.f32 %v925, %v288
        %v1230 = vmul.f32 %v926, %v292
        %v1231 = vmul.f32 %v927, %v296
        %v1232 = vmul.f32 %v928, %v300
        %v1233 = vmul.f32 %v929, %v304
        %v1234 = vmul.f32 %v930, %v308
        %v1235 = vmul.f32 %v931, %v312
        %v1236 = vmul.f32 %v932, %v316
        %v1237 = vmul.f32 %v933, %v320
        %v1238 = vmul.f32 %v934, %v324
        %v1239 = vmul.f32 %v935, %v328
        %v1240 = vmul.f32 %v936, %v332
        %v1241 = vmul.f32 %v937, %v336
        %v1242 = vmul.f32 %v938, %v343
        %v1243 = vmul.f32 %v939, %v347
        %v1244 = vmul.f32 %v940, %v351
        %v1245 = vmul.f32 %v941, %v355
        %v1246 = vmul.f32 %v942, %v359
        %v1247 = vmul.f32 %v943, %v363
        %v1248 = vmul.f32 %v944, %v367
        %v1249 = vmul.f32 %v945, %v371
        %v1250 = vmul.f32 %v946, %v375
        %v1251 = vmul.f32 %v947, %v379
        %v1252 = vmul.f32 %v948, %v383
        %v1253 = vmul.f32 %v949, %v387
        %v1254 = vmul.f32 %v950, %v391
        %v1255 = vmul.f32 %v951, %v395
        %v1256 = vmul.f32 %v952, %v399
        %v1257 = vmul.f32 %v953, %v403
        %v1258 = vmul.f32 %v954, %v410
        %v1259 = vmul.f32 %v955, %v414
        %v1260 = vmul.f32 %v956, %v418
        %v1261 = vmul.f32 %v957, %v422
        %v1262 = vmul.f32 %v958, %v426
        %v1263 = vmul.f32 %v959, %v430
        %v1264 = vmul.f32 %v960, %v434
        %v1265 = vmul.f32 %v961, %v438
        %v1266 = vmul.f32 %v962, %v442
        %v1267 = vmul.f32 %v963, %v446
        %v1268 = vmul.f32 %v964, %v450
        %v1269 = vmul.f32 %v965, %v454
        %v1270 = vmul.f32 %v966, %v458
        %v1271 = vmul.f32 %v967, %v462
        %v1272 = vmul.f32 %v968, %v466
        %v1273 = vmul.f32 %v969, %v470
        %v1274 = vmul.f32 %v970, %v477
        %v1275 = vmul.f32 %v971, %v481
        %v1276 = vmul.f32 %v972, %v485
        %v1277 = vmul.f32 %v973, %v489
        %v1278 = vmul.f32 %v974, %v493
        %v1279 = vmul.f32 %v975, %v497
        %v1280 = vmul.f32 %v976, %v501
        %v1281 = vmul.f32 %v977, %v505
        %v1282 = vmul.f32 %v978, %v509
        %v1283 = vmul.f32 %v979, %v513
        %v1284 = vmul.f32 %v980, %v517
        %v1285 = vmul.f32 %v981, %v521
        %v1286 = vmul.f32 %v982, %v525
        %v1287 = vmul.f32 %v983, %v529
        %v1288 = vmul.f32 %v984, %v533
        %v1289 = vmul.f32 %v985, %v537
        %v1290 = vmul.f32 %v986, %v544
        %v1291 = vmul.f32 %v987, %v548
        %v1292 = vmul.f32 %v988, %v552
        %v1293 = vmul.f32 %v989, %v556
        %v1294 = vmul.f32 %v990, %v560
        %v1295 = vmul.f32 %v991, %v564
        %v1296 = vmul.f32 %v992, %v568
        %v1297 = vmul.f32 %v993, %v572
        %v1298 = vmul.f32 %v994, %v576
        %v1299 = vmul.f32 %v995, %v580
        %v1300 = vmul.f32 %v996, %v584
        %v1301 = vmul.f32 %v997, %v588
        %v1302 = vmul.f32 %v998, %v592
        %v1303 = vmul.f32 %v999, %v596
        %v1304 = vmul.f32 %v1000, %v600
        %v1305 = vmul.f32 %v1001, %v604
        %v1306 = vmul.f32 %v1002, %v611
        %v1307 = vmul.f32 %v1003, %v615
        %v1308 = vmul.f32 %v1004, %v619
        %v1309 = vmul.f32 %v1005, %v623
        %v1310 = vmul.f32 %v1006, %v627
        %v1311 = vmul.f32 %v1007, %v631
        %v1312 = vmul.f32 %v1008, %v635
        %v1313 = vmul.f32 %v1009, %v639
        %v1314 = vmul.f32 %v1010, %v643
        %v1315 = vmul.f32 %v1011, %v647
        %v1316 = vmul.f32 %v1012, %v651
        %v1317 = vmul.f32 %v1013, %v655
        %v1318 = vmul.f32 %v1014, %v659
        %v1319 = vmul.f32 %v1015, %v663
        %v1320 = vmul.f32 %v1016, %v667
        %v1321 = vmul.f32 %v1017, %v671
        %v1322 = vadd.f32 %v1194, %v1195
        %v1323 = vadd.f32 %v1322, %v1196
        %v1324 = vadd.f32 %v1323, %v1197
        %v1325 = vadd.f32 %v1324, %v1198
        %v1326 = vadd.f32 %v1325, %v1199
        %v1327 = vadd.f32 %v1326, %v1200
        %v1328 = vadd.f32 %v1327, %v1201
        %v1329 = vadd.f32 %v1328, %v1202
        %v1330 = vadd.f32 %v1329, %v1203
        %v1331 = vadd.f32 %v1330, %v1204
        %v1332 = vadd.f32 %v1331, %v1205
        %v1333 = vadd.f32 %v1332, %v1206
        %v1334 = vadd.f32 %v1333, %v1207
        %v1335 = vadd.f32 %v1334, %v1208
        %v1336 = vadd.f32 %v1335, %v1209
        %v1337 = vrot.slane %v1336, 4
        %v1338 = vadd.f32 %v1336, %v1337
        %v1339 = vrot.slane %v1338, 2
        %v1340 = vadd.f32 %v1338, %v1339
        %v1341 = vrot.slane %v1340, 1
        %v1342 = vadd.f32 %v1340, %v1341
        %v1343 = vadd.f32 %v1210, %v1211
        %v1344 = vadd.f32 %v1343, %v1212
        %v1345 = vadd.f32 %v1344, %v1213
        %v1346 = vadd.f32 %v1345, %v1214
        %v1347 = vadd.f32 %v1346, %v1215
        %v1348 = vadd.f32 %v1347, %v1216
        %v1349 = vadd.f32 %v1348, %v1217
        %v1350 = vadd.f32 %v1349, %v1218
        %v1351 = vadd.f32 %v1350, %v1219
        %v1352 = vadd.f32 %v1351, %v1220
        %v1353 = vadd.f32 %v1352, %v1221
        %v1354 = vadd.f32 %v1353, %v1222
        %v1355 = vadd.f32 %v1354, %v1223
        %v1356 = vadd.f32 %v1355, %v1224
        %v1357 = vadd.f32 %v1356, %v1225
        %v1358 = vrot.slane %v1357, 4
        %v1359 = vadd.f32 %v1357, %v1358
        %v1360 = vrot.slane %v1359, 2
        %v1361 = vadd.f32 %v1359, %v1360
        %v1362 = vrot.slane %v1361, 1
        %v1363 = vadd.f32 %v1361, %v1362
        %v1364 = vadd.f32 %v1226, %v1227
        %v1365 = vadd.f32 %v1364, %v1228
        %v1366 = vadd.f32 %v1365, %v1229
        %v1367 = vadd.f32 %v1366, %v1230
        %v1368 = vadd.f32 %v1367, %v1231
        %v1369 = vadd.f32 %v1368, %v1232
        %v1370 = vadd.f32 %v1369, %v1233
        %v1371 = vadd.f32 %v1370, %v1234
        %v1372 = vadd.f32 %v1371, %v1235
        %v1373 = vadd.f32 %v1372, %v1236
        %v1374 = vadd.f32 %v1373, %v1237
        %v1375 = vadd.f32 %v1374, %v1238
        %v1376 = vadd.f32 %v1375, %v1239
        %v1377 = vadd.f32 %v1376, %v1240
        %v1378 = vadd.f32 %v1377, %v1241
        %v1379 = vrot.slane %v1378, 4
        %v1380 = vadd.f32 %v1378, %v1379
        %v1381 = vrot.slane %v1380, 2
        %v1382 = vadd.f32 %v1380, %v1381
        %v1383 = vrot.slane %v1382, 1
        %v1384 = vadd.f32 %v1382, %v1383
        %v1385 = vadd.f32 %v1242, %v1243
        %v1386 = vadd.f32 %v1385, %v1244
        %v1387 = vadd.f32 %v1386, %v1245
        %v1388 = vadd.f32 %v1387, %v1246
        %v1389 = vadd.f32 %v1388, %v1247
        %v1390 = vadd.f32 %v1389, %v1248
        %v1391 = vadd.f32 %v1390, %v1249
        %v1392 = vadd.f32 %v1391, %v1250
        %v1393 = vadd.f32 %v1392, %v1251
        %v1394 = vadd.f32 %v1393, %v1252
        %v1395 = vadd.f32 %v1394, %v1253
        %v1396 = vadd.f32 %v1395, %v1254
        %v1397 = vadd.f32 %v1396, %v1255
        %v1398 = vadd.f32 %v1397, %v1256
        %v1399 = vadd.f32 %v1398, %v1257
        %v1400 = vrot.slane %v1399, 4
        %v1401 = vadd.f32 %v1399, %v1400
        %v1402 = vrot.slane %v1401, 2
        %v1403 = vadd.f32 %v1401, %v1402
        %v1404 = vrot.slane %v1403, 1
        %v1405 = vadd.f32 %v1403, %v1404
        %v1406 = vadd.f32 %v1258, %v1259
        %v1407 = vadd.f32 %v1406, %v1260
        %v1408 = vadd.f32 %v1407, %v1261
        %v1409 = vadd.f32 %v1408, %v1262
        %v1410 = vadd.f32 %v1409, %v1263
        %v1411 = vadd.f32 %v1410, %v1264
        %v1412 = vadd.f32 %v1411, %v1265
        %v1413 = vadd.f32 %v1412, %v1266
        %v1414 = vadd.f32 %v1413, %v1267
        %v1415 = vadd.f32 %v1414, %v1268
        %v1416 = vadd.f32 %v1415, %v1269
        %v1417 = vadd.f32 %v1416, %v1270
        %v1418 = vadd.f32 %v1417, %v1271
        %v1419 = vadd.f32 %v1418, %v1272
        %v1420 = vadd.f32 %v1419, %v1273
        %v1421 = vrot.slane %v1420, 4
        %v1422 = vadd.f32 %v1420, %v1421
        %v1423 = vrot.slane %v1422, 2
        %v1424 = vadd.f32 %v1422, %v1423
        %v1425 = vrot.slane %v1424, 1
        %v1426 = vadd.f32 %v1424, %v1425
        %v1427 = vadd.f32 %v1274, %v1275
        %v1428 = vadd.f32 %v1427, %v1276
        %v1429 = vadd.f32 %v1428, %v1277
        %v1430 = vadd.f32 %v1429, %v1278
        %v1431 = vadd.f32 %v1430, %v1279
        %v1432 = vadd.f32 %v1431, %v1280
        %v1433 = vadd.f32 %v1432, %v1281
        %v1434 = vadd.f32 %v1433, %v1282
        %v1435 = vadd.f32 %v1434, %v1283
        %v1436 = vadd.f32 %v1435, %v1284
        %v1437 = vadd.f32 %v1436, %v1285
        %v1438 = vadd.f32 %v1437, %v1286
        %v1439 = vadd.f32 %v1438, %v1287
        %v1440 = vadd.f32 %v1439, %v1288
        %v1441 = vadd.f32 %v1440, %v1289
        %v1442 = vrot.slane %v1441, 4
        %v1443 = vadd.f32 %v1441, %v1442
        %v1444 = vrot.slane %v1443, 2
        %v1445 = vadd.f32 %v1443, %v1444
        %v1446 = vrot.slane %v1445, 1
        %v1447 = vadd.f32 %v1445, %v1446
        %v1448 = vadd.f32 %v1290, %v1291
        %v1449 = vadd.f32 %v1448, %v1292
        %v1450 = vadd.f32 %v1449, %v1293
        %v1451 = vadd.f32 %v1450, %v1294
        %v1452 = vadd.f32 %v1451, %v1295
        %v1453 = vadd.f32 %v1452, %v1296
        %v1454 = vadd.f32 %v1453, %v1297
        %v1455 = vadd.f32 %v1454, %v1298
        %v1456 = vadd.f32 %v1455, %v1299
        %v1457 = vadd.f32 %v1456, %v1300
        %v1458 = vadd.f32 %v1457, %v1301
        %v1459 = vadd.f32 %v1458, %v1302
        %v1460 = vadd.f32 %v1459, %v1303
        %v1461 = vadd.f32 %v1460, %v1304
        %v1462 = vadd.f32 %v1461, %v1305
        %v1463 = vrot.slane %v1462, 4
        %v1464 = vadd.f32 %v1462, %v1463
        %v1465 = vrot.slane %v1464, 2
        %v1466 = vadd.f32 %v1464, %v1465
        %v1467 = vrot.slane %v1466, 1
        %v1468 = vadd.f32 %v1466, %v1467
        %v1469 = vadd.f32 %v1306, %v1307
        %v1470 = vadd.f32 %v1469, %v1308
        %v1471 = vadd.f32 %v1470, %v1309
        %v1472 = vadd.f32 %v1471, %v1310
        %v1473 = vadd.f32 %v1472, %v1311
        %v1474 = vadd.f32 %v1473, %v1312
        %v1475 = vadd.f32 %v1474, %v1313
        %v1476 = vadd.f32 %v1475, %v1314
        %v1477 = vadd.f32 %v1476, %v1315
        %v1478 = vadd.f32 %v1477, %v1316
        %v1479 = vadd.f32 %v1478, %v1317
        %v1480 = vadd.f32 %v1479, %v1318
        %v1481 = vadd.f32 %v1480, %v1319
        %v1482 = vadd.f32 %v1481, %v1320
        %v1483 = vadd.f32 %v1482, %v1321
        %v1484 = vrot.slane %v1483, 4
        %v1485 = vadd.f32 %v1483, %v1484
        %v1486 = vrot.slane %v1485, 2
        %v1487 = vadd.f32 %v1485, %v1486
        %v1488 = vrot.slane %v1487, 1
        %v1489 = vadd.f32 %v1487, %v1488
        %v1490 = vadd.f32 %v1342, 0.0
        %v1491 = vadd.f32 %v1363, 0.0
        %v1492 = vadd.f32 %v1384, 0.0
        %v1493 = vadd.f32 %v1405, 0.0
        %v1494 = vadd.f32 %v1426, 0.0
        %v1495 = vadd.f32 %v1447, 0.0
        %v1496 = vadd.f32 %v1468, 0.0
        %v1497 = vadd.f32 %v1489, 0.0
        %v1498 = vrot.slane %v135, 1
        %v1499 = vrot.slane %v135, 2
        %v1500 = vrot.slane %v135, 3
        %v1501 = vrot.slane %v135, 4
        %v1502 = vrot.slane %v135, 5
        %v1503 = vrot.slane %v135, 6
        %v1504 = vrot.slane %v135, 7
        %v1513 = vmul.f32 %v1186, %v135
        %v1514 = vmul.f32 %v1187, %v1498
        %v1515 = vmul.f32 %v1188, %v1499
        %v1516 = vmul.f32 %v1189, %v1500
        %v1517 = vmul.f32 %v1190, %v1501
        %v1518 = vmul.f32 %v1191, %v1502
        %v1519 = vmul.f32 %v1192, %v1503
        %v1520 = vmul.f32 %v1193, %v1504
        %v1521 = vadd.f32 %v1513, 1.0
        %v1522 = vadd.f32 %v1514, 1.0
        %v1523 = vadd.f32 %v1515, 1.0
        %v1524 = vadd.f32 %v1516, 1.0
        %v1525 = vadd.f32 %v1517, 1.0
        %v1526 = vadd.f32 %v1518, 1.0
        %v1527 = vadd.f32 %v1519, 1.0
        %v1528 = vadd.f32 %v1520, 1.0
        %vm1529 = vcmp.gt.f32.partialorder %v1521, %v1490
        %vm1530 = vcmp.gt.f32.partialorder %v1522, %v1491
        %vm1531 = vcmp.gt.f32.partialorder %v1523, %v1492
        %vm1532 = vcmp.gt.f32.partialorder %v1524, %v1493
        %vm1533 = vcmp.gt.f32.partialorder %v1525, %v1494
        %vm1534 = vcmp.gt.f32.partialorder %v1526, %v1495
        %vm1535 = vcmp.gt.f32.partialorder %v1527, %v1496
        %vm1536 = vcmp.gt.f32.partialorder %v1528, %v1497
        %v1537 = vsel %vm1529, 1, 0
        %v1538 = vsel %vm1530, 1, 0
        %v1539 = vsel %vm1531, 1, 0
        %v1540 = vsel %vm1532, 1, 0
        %v1541 = vsel %vm1533, 1, 0
        %v1542 = vsel %vm1534, 1, 0
        %v1543 = vsel %vm1535, 1, 0
        %v1544 = vsel %vm1536, 1, 0
        %v1545 = vcvt.s32.f32 %v1537
        %v1546 = vcvt.s32.f32 %v1538
        %v1547 = vcvt.s32.f32 %v1539
        %v1548 = vcvt.s32.f32 %v1540
        %v1549 = vcvt.s32.f32 %v1541
        %v1550 = vcvt.s32.f32 %v1542
        %v1551 = vcvt.s32.f32 %v1543
        %v1552 = vcvt.s32.f32 %v1544
        %v1561 = vrot.slane %v1546, 7
        %vm1562 = vcmask 1041409
        %v1563 = vsel %vm1562, %v1561, %v1545
        %v1564 = vrot.slane %v1547, 6
        %vm1565 = vcmask 1042434
        %v1566 = vsel %vm1565, %v1564, %v1563
        %v1567 = vrot.slane %v1548, 5
        %vm1568 = vcmask 1043459
        %v1569 = vsel %vm1568, %v1567, %v1566
        %v1570 = vrot.slane %v1549, 4
        %vm1571 = vcmask 1044484
        %v1572 = vsel %vm1571, %v1570, %v1569
        %v1573 = vrot.slane %v1550, 3
        %vm1574 = vcmask 1045509
        %v1575 = vsel %vm1574, %v1573, %v1572
        %v1576 = vrot.slane %v1551, 2
        %vm1577 = vcmask 1046534
        %v1578 = vsel %vm1577, %v1576, %v1575
        %v1579 = vrot.slane %v1552, 1
        %vm1580 = vcmask 1047559
        %v1581 = vsel %vm1580, %v1579, %v1578
        %1583 = vadd.xlane.f32.xlu0 %v1581
        %v1584 = vpop.xlane.xlu0 %1583
        %v1585 = vmul.f32 %v1545, %v135
        %v1586 = vmul.f32 %v1546, %v1498
        %v1587 = vmul.f32 %v1547, %v1499
        %v1588 = vmul.f32 %v1548, %v1500
        %v1589 = vmul.f32 %v1549, %v1501
        %v1590 = vmul.f32 %v1550, %v1502
        %v1591 = vmul.f32 %v1551, %v1503
        %v1592 = vmul.f32 %v1552, %v1504
        %v1601 = vrot.slane %v1586, 7
        %v1602 = vsel %vm1562, %v1601, %v1585
        %v1603 = vrot.slane %v1587, 6
        %v1604 = vsel %vm1565, %v1603, %v1602
        %v1605 = vrot.slane %v1588, 5
        %v1606 = vsel %vm1568, %v1605, %v1604
        %v1607 = vrot.slane %v1589, 4
        %v1608 = vsel %vm1571, %v1607, %v1606
        %v1609 = vrot.slane %v1590, 3
        %v1610 = vsel %vm1574, %v1609, %v1608
        %v1611 = vrot.slane %v1591, 2
        %v1612 = vsel %vm1577, %v1611, %v1610
        %v1613 = vrot.slane %v1592, 1
        %v1614 = vsel %vm1580, %v1613, %v1612
        %1616 = vadd.xlane.f32.xlu0 %v1614
        %v1617 = vpop.xlane.xlu0 %1616
        %v1618 = vsub.f32 %v1617, 1.0
        %v1619 = vrcp.pop %v1584
        %v1620 = vmul.f32 %v1618, %v1619
        %v1621 = vsub.f32 %v135, %v1620
        %v1622 = vmax.f32 %v1621, 0.0
        %v1623 = vlog2.pop %v1622
        %v1624 = vmul.f32 %v1623, 0.6931472
        %1625 = vst [vmem:[%s131] sm:$0xff] %v1624
        %s1626 = sand.u32 %s52, 1
        %s1627 = scalar_lea.sflag [#allocation4], %s1626
        %s1628 = sand.u32 %s52, 1
        %s1629 = smul.addr %s1628, 8
        %s1630 = scalar_lea.vmem [#allocation5], %s1629
        // Predicated region
        $region29: #{tpu_custom_call.1} parent=23 // pred_check
          %p1631 = pneg %p62
        $region30: #{tpu_custom_call.1} parent=23 // pred_check_branch
          %1633 = sbr.rel (%p1631) target = $region32
        $region31: #{tpu_custom_call.1} parent=23 // pred_region
          %s1635 = ssub.s32 128, 128
          %1636 = vsyncadd %s1627, %s1635
          %s1637 = smul.addr %s18, 128
          %s1638 = scalar_lea.hbm %s1, %s1637
          %s1640 = sshll.u32 %s1630, 4
          %s1641 = int_to_ptr.vmem [resolvable:$true] %s1640
          %1643 = dma.vmem_to_hbm [thread:$0]  %s1641, 128, %s1638, %s1627
        $region32: #{tpu_custom_call.1} parent=23 // pred_fallthru
          _
      $region24: #{tpu_custom_call.1} parent=5 // pred_fallthru
        _
      %p1644 = scmp.le.s32.totalorder 2, %s13
      // Predicated region
      $region33: #{tpu_custom_call.1} parent=5 // pred_check
        %p1645 = pneg %p1644
      $region34: #{tpu_custom_call.1} parent=5 // pred_check_branch
        %1647 = sbr.rel (%p1645) target = $region36
      $region35: #{tpu_custom_call.1} parent=5 // pred_region
        %s1648 = ssub.s32 %s13, 2
        // Predicated region
        $region37: #{tpu_custom_call.1} parent=35 // pred_check
          %p1649 = pneg %p68
        $region38: #{tpu_custom_call.1} parent=35 // pred_check_branch
          %1651 = sbr.rel (%p1649) target = $region40
        $region39: #{tpu_custom_call.1} parent=35 // pred_region
          %s1652 = sand.u32 %s53, 1
          %s1653 = scalar_lea.sflag [#allocation4], %s1652
          %s1654 = sand.u32 %s53, 1
          %s1655 = smul.addr %s1654, 8
          %s1656 = scalar_lea.vmem [#allocation5], %s1655
          %1657 = dma.done %s1653, 128
        $region40: #{tpu_custom_call.1} parent=35 // pred_fallthru
          _
      $region36: #{tpu_custom_call.1} parent=5 // pred_fallthru
        _
    $region6: #{tpu_custom_call.1} parent=1 // loop_footer
      %s17 = sadd.s32 1, %s13
    $region7: #{tpu_custom_call.1} parent=1 // loop_footer_branch
      %12 = sbr.rel target = $region3
    $region8: #{tpu_custom_call.1} parent=1 // loop_exit
      _
    %1658 = vsyncpa [#allocation3], 1
    %s1659 = scalar_lea.sflag [#allocation3], 1
    %1660 = vsyncpa %s1659, 1
    %1661 = vsyncpa [#allocation4], 1
    %s1662 = scalar_lea.sflag [#allocation4], 1
    %1663 = vsyncpa %s1662, 1

</llo_original>
